<compile_context>
chip_gen: v7x
topology: tpu7x:2x2x1
jax: 0.10.0
libtpu: 0.0.40
codegen_flags: <defaults>
</compile_context>

<pallas_src>
import functools

import jax
import jax.numpy as jnp
from jax import lax
from jax.experimental import pallas as pl
from jax.experimental.pallas import tpu as pltpu

EPS = 1e-5
F32 = jnp.float32
BF16 = jnp.bfloat16


# ----------------------------- Pallas kernels ------------------------------

def _reduce_qkv_kernel(x_ref, w1_ref, b1_ref, wq_ref, bq_ref, red_ref, qkv_ref):
    """conv1 (1x1 + folded BN + ReLU) fused with the q/k/v projections of all
    per-patch NonLocal blocks (one wide, lane-dense matmul)."""
    red = jnp.dot(x_ref[0], w1_ref[...], preferred_element_type=F32) + b1_ref[...]
    red = jnp.maximum(red, 0.0)
    red_ref[0] = red
    qkv_ref[0] = (jnp.dot(red.astype(BF16), wq_ref[...],
                          preferred_element_type=F32) + bq_ref[...])


def reduce_and_project(x_flat, w1, b1, wqkv, bqkv):
    """x_flat: (B, N, Cin) bf16 -> (red (B,N,Cr) f32, qkv (B,N,Kq) f32)."""
    B, N, Cin = x_flat.shape
    Cr = w1.shape[1]
    Kq = wqkv.shape[1]
    return pl.pallas_call(
        _reduce_qkv_kernel,
        out_shape=(jax.ShapeDtypeStruct((B, N, Cr), F32),
                   jax.ShapeDtypeStruct((B, N, Kq), F32)),
        grid=(B,),
        in_specs=[
            pl.BlockSpec((1, N, Cin), lambda b: (b, 0, 0)),
            pl.BlockSpec((Cin, Cr), lambda b: (0, 0)),
            pl.BlockSpec((1, Cr), lambda b: (0, 0)),
            pl.BlockSpec((Cr, Kq), lambda b: (0, 0)),
            pl.BlockSpec((1, Kq), lambda b: (0, 0)),
        ],
        out_specs=(pl.BlockSpec((1, N, Cr), lambda b: (b, 0, 0)),
                   pl.BlockSpec((1, N, Kq), lambda b: (b, 0, 0))),
        compiler_params=pltpu.CompilerParams(dimension_semantics=("parallel",)),
    )(x_flat, w1, b1, wqkv, bqkv)


def _matmul_bias_kernel(x_ref, w_ref, b_ref, o_ref, *, relu):
    y = jnp.dot(x_ref[0], w_ref[...], preferred_element_type=F32) + b_ref[...]
    if relu:
        y = jnp.maximum(y, 0.0)
    o_ref[0] = y


def pointwise(x_flat, w, b, *, relu):
    """Fused 1x1 conv (+ folded BN) (+ ReLU).  x_flat: (B, N, Cin) bf16."""
    B, N, Cin = x_flat.shape
    Cout = w.shape[1]
    return pl.pallas_call(
        functools.partial(_matmul_bias_kernel, relu=relu),
        out_shape=jax.ShapeDtypeStruct((B, N, Cout), F32),
        grid=(B,),
        in_specs=[
            pl.BlockSpec((1, N, Cin), lambda b: (b, 0, 0)),
            pl.BlockSpec((Cin, Cout), lambda b: (0, 0)),
            pl.BlockSpec((1, Cout), lambda b: (0, 0)),
        ],
        out_specs=pl.BlockSpec((1, N, Cout), lambda b: (b, 0, 0)),
        compiler_params=pltpu.CompilerParams(dimension_semantics=("parallel",)),
    )(x_flat, w, b)


def _gca_nonlocal_kernel(x_ref, w_ref, b_ref, o_ref, *, gamma, ci):
    """GCA_Channel NonLocal: fused q/k/v projection + attention + sigmoid."""
    x = x_ref[0]                                                    # (Np, C) f32
    qkv = (jnp.dot(x.astype(BF16), w_ref[...], preferred_element_type=F32)
           + b_ref[...])
    q = qkv[:, :ci]
    k = qkv[:, ci:2 * ci]
    v = qkv[:, 2 * ci:]
    energy = lax.dot_general(q, k, (((1,), (1,)), ((), ())),
                             preferred_element_type=F32)            # (Np, Np)
    energy = energy - jnp.max(energy, axis=-1, keepdims=True)
    p = jnp.exp(energy)
    # NOTE: the row-sum reciprocal is a tiny (Np,1) op; pl.reciprocal(...,
    # approx=True) could push it to the EUP slot on hardware.
    attn = p * (1.0 / jnp.sum(p, axis=-1, keepdims=True))
    out = jnp.dot(attn, v, preferred_element_type=F32)              # (Np, C)
    o_ref[0] = jax.nn.sigmoid(gamma * out + x)


def gca_nonlocal(pooled_flat, w, b, *, gamma, ci):
    B, Np, C = pooled_flat.shape
    K = w.shape[1]
    cost = pl.CostEstimate(
        flops=2 * B * Np * (C * K + Np * ci + Np * C),
        transcendentals=B * Np * (Np + C),
        bytes_accessed=8 * B * Np * C + 2 * C * K,
    )
    return pl.pallas_call(
        functools.partial(_gca_nonlocal_kernel, gamma=float(gamma), ci=ci),
        out_shape=jax.ShapeDtypeStruct((B, Np, C), F32),
        grid=(B,),
        in_specs=[
            pl.BlockSpec((1, Np, C), lambda b: (b, 0, 0)),
            pl.BlockSpec((C, K), lambda b: (0, 0)),
            pl.BlockSpec((1, K), lambda b: (0, 0)),
        ],
        out_specs=pl.BlockSpec((1, Np, C), lambda b: (b, 0, 0)),
        compiler_params=pltpu.CompilerParams(dimension_semantics=("parallel",)),
        cost_estimate=cost,
    )(pooled_flat, w, b)


def _patch_attn_kernel(qkv_ref, x_ref, ps_ref, o_ref, *, gamma, ci):
    """All s*s per-patch NonLocal blocks of one batch element in one step.
    qkv was precomputed by the fused projection; attention is a batched
    dot_general over the patch axis."""
    qkv = qkv_ref[0]                                     # (P, Np, 2ci+C) f32
    x = x_ref[0]                                         # (P, Np, C)     f32
    q = qkv[:, :, :ci]
    k = qkv[:, :, ci:2 * ci]
    v = qkv[:, :, 2 * ci:]
    energy = jnp.einsum("pni,pmi->pnm", q, k, preferred_element_type=F32)
    energy = energy - jnp.max(energy, axis=-1, keepdims=True)
    p = jnp.exp(energy)
    attn = p * (1.0 / jnp.sum(p, axis=-1, keepdims=True))
    out = jnp.einsum("pnm,pmd->pnd", attn, v, preferred_element_type=F32)
    # ps_ref[0]: (P, 1, C) per-patch GCA weighting; broadcasts over Np.
    o_ref[0] = (gamma * out + x) * ps_ref[0]


def patch_attention(qkv_p, x_p, ps, *, gamma, ci):
    B, P, Np, K = qkv_p.shape
    C = x_p.shape[-1]
    cost = pl.CostEstimate(
        flops=2 * B * P * Np * Np * (ci + C),
        transcendentals=B * P * Np * Np,
        bytes_accessed=4 * (qkv_p.size + 2 * x_p.size + ps.size),
    )
    return pl.pallas_call(
        functools.partial(_patch_attn_kernel, gamma=float(gamma), ci=ci),
        out_shape=jax.ShapeDtypeStruct((B, P, Np, C), F32),
        grid=(B,),
        in_specs=[
            pl.BlockSpec((1, P, Np, K), lambda b: (b, 0, 0, 0)),
            pl.BlockSpec((1, P, Np, C), lambda b: (b, 0, 0, 0)),
            pl.BlockSpec((1, P, 1, C), lambda b: (b, 0, 0, 0)),
        ],
        out_specs=pl.BlockSpec((1, P, Np, C), lambda b: (b, 0, 0, 0)),
        compiler_params=pltpu.CompilerParams(dimension_semantics=("parallel",)),
        cost_estimate=cost,
    )(qkv_p, x_p, ps)


def _conv3_kernel(xc_ref, res_ref, w_ref, b_ref, o_ref):
    # BN scale and the AGCB gamma are pre-folded into w/b; epilogue is just
    # shift + residual + ReLU.
    y = jnp.dot(xc_ref[0], w_ref[...], preferred_element_type=F32)
    o_ref[0] = jnp.maximum(y + b_ref[...] + res_ref[0], 0.0)


def _im2col_3x3(img):
    """(B, H, W, C) -> (B, H*W, 9*C), tap-major (dh, dw, c)."""
    B, H, W, C = img.shape
    xp = jnp.pad(img, ((0, 0), (1, 1), (1, 1), (0, 0)))
    taps = [xp[:, dh:dh + H, dw:dw + W, :] for dh in range(3) for dw in range(3)]
    return jnp.concatenate(taps, axis=-1).reshape(B, H * W, 9 * C)


def conv3x3_bn_residual_relu(ctx_img, res_img, w9, b9):
    """3x3 conv (pad=1) with folded BN*gamma + residual + ReLU (NHWC images)."""
    B, H, W, C = ctx_img.shape
    Cout = w9.shape[1]
    N = H * W
    # TODO(synk): im2col is built in HBM (9x conv-input traffic); in-kernel
    # shifted-tap accumulation needs an (H, W, C)->(H*W, C) reshape that Mosaic
    # does not lower reliably, so this glue stays in XLA (bf16 to halve bytes).
    xc = _im2col_3x3(ctx_img.astype(BF16))
    res = res_img.reshape(B, N, Cout)
    cost = pl.CostEstimate(
        flops=2 * B * N * 9 * C * Cout,
        transcendentals=0,
        bytes_accessed=2 * xc.size + 4 * (res.size + B * N * Cout) + 2 * w9.size,
    )
    out = pl.pallas_call(
        _conv3_kernel,
        out_shape=jax.ShapeDtypeStruct((B, N, Cout), F32),
        grid=(B,),
        in_specs=[
            pl.BlockSpec((1, N, 9 * C), lambda b: (b, 0, 0)),
            pl.BlockSpec((1, N, Cout), lambda b: (b, 0, 0)),
            pl.BlockSpec((9 * C, Cout), lambda b: (0, 0)),
            pl.BlockSpec((1, Cout), lambda b: (0, 0)),
        ],
        out_specs=pl.BlockSpec((1, N, Cout), lambda b: (b, 0, 0)),
        compiler_params=pltpu.CompilerParams(dimension_semantics=("parallel",)),
        cost_estimate=cost,
    )(xc, res, w9, b9)
    return out.reshape(B, H, W, Cout)


# ----------------------- dispatch (pallas vs pure-JAX ref) ------------------

def run_reduce_and_project(x_flat, w1, b1, wqkv, bqkv, *, use_pallas):
    if use_pallas:
        return reduce_and_project(x_flat, w1, b1, wqkv, bqkv)
    red = jnp.maximum(
        jnp.einsum("bnc,ck->bnk", x_flat, w1, preferred_element_type=F32) + b1, 0.0)
    qkv = jnp.einsum("bnc,ck->bnk", red.astype(BF16), wqkv,
                     preferred_element_type=F32) + bqkv
    return red, qkv


def run_pointwise(x_flat, w, b, *, relu, use_pallas):
    if use_pallas:
        return pointwise(x_flat, w, b, relu=relu)
    y = jnp.einsum("bnc,ck->bnk", x_flat, w, preferred_element_type=F32) + b
    return jnp.maximum(y, 0.0) if relu else y


def run_gca(pooled_flat, w, b, *, gamma, ci, use_pallas):
    if use_pallas:
        return gca_nonlocal(pooled_flat, w, b, gamma=gamma, ci=ci)
    qkv = jnp.einsum("bnc,ck->bnk", pooled_flat.astype(BF16), w,
                     preferred_element_type=F32) + b
    q, k, v = qkv[..., :ci], qkv[..., ci:2 * ci], qkv[..., 2 * ci:]
    energy = jnp.einsum("bni,bmi->bnm", q, k, preferred_element_type=F32)
    attn = jax.nn.softmax(energy, axis=-1)
    out = jnp.einsum("bnm,bmd->bnd", attn, v, preferred_element_type=F32)
    return jax.nn.sigmoid(gamma * out + pooled_flat)


def run_patch_attention(qkv_p, x_p, ps, *, gamma, ci, use_pallas):
    if use_pallas:
        return patch_attention(qkv_p, x_p, ps, gamma=gamma, ci=ci)
    q, k, v = qkv_p[..., :ci], qkv_p[..., ci:2 * ci], qkv_p[..., 2 * ci:]
    energy = jnp.einsum("bpni,bpmi->bpnm", q, k, preferred_element_type=F32)
    attn = jax.nn.softmax(energy, axis=-1)
    out = jnp.einsum("bpnm,bpmd->bpnd", attn, v, preferred_element_type=F32)
    return (gamma * out + x_p) * ps


def run_conv3(ctx_img, res_img, w9, b9, *, use_pallas):
    if use_pallas:
        return conv3x3_bn_residual_relu(ctx_img, res_img, w9, b9)
    B, H, W, C = ctx_img.shape
    xc = _im2col_3x3(ctx_img.astype(BF16))
    y = jnp.einsum("bnc,ck->bnk", xc, w9, preferred_element_type=F32) + b9
    y = y + res_img.reshape(B, H * W, -1)
    return jnp.maximum(y, 0.0).reshape(B, H, W, -1)


# ------------------------------ glue helpers --------------------------------

def adaptive_max_pool(x_img, s):
    """Plain JAX: trivially memory-bound; divisible case only."""
    B, H, W, C = x_img.shape
    # TODO(synk): non-divisible adaptive pooling windows not implemented.
    assert H % s == 0 and W % s == 0
    return jnp.max(x_img.reshape(B, s, H // s, s, W // s, C), axis=(2, 4))


def _patchify(img, s):
    """(B, H, W, K) -> (B, s*s, (H//s)*(W//s), K), patch index = i*s + j."""
    B, H, W, K = img.shape
    ph, pw = H // s, W // s
    t = img.reshape(B, s, ph, s, pw, K).transpose(0, 1, 3, 2, 4, 5)
    return t.reshape(B, s * s, ph * pw, K)


def _unpatchify(pat, s, H, W):
    B, P, Np, K = pat.shape
    ph, pw = H // s, W // s
    t = pat.reshape(B, s, s, ph, pw, K).transpose(0, 1, 3, 2, 4, 5)
    return t.reshape(B, H, W, K)


# ------------------------------- CPM model ----------------------------------

def agcb_patch(red_img, qkv_img, p, s, *, use_pallas):
    """AGCB_Patch (att_mode='origin') on NHWC image (B, H, W, C)."""
    B, H, W, C = red_img.shape
    ci = p["ci"]
    # --- GCA_Channel: adaptive max pool -> NonLocal (fused qkv) -> sigmoid ---
    pooled = adaptive_max_pool(red_img, s).reshape(B, s * s, C)
    gca = run_gca(pooled, p["gca_w"], p["gca_b"], gamma=p["gca_gamma"], ci=ci,
                  use_pallas=use_pallas)                         # (B, s*s, C)
    # --- per-patch NonLocal: all s*s patches per batch element in one step ---
    qkv_p = _patchify(qkv_img, s)                                # (B, P, Np, 2ci+C)
    x_p = _patchify(red_img, s)                                  # (B, P, Np, C)
    ps = gca.reshape(B, s * s, 1, C)
    ctx_p = run_patch_attention(qkv_p, x_p, ps, gamma=p["nl_gamma"], ci=ci,
                                use_pallas=use_pallas)
    ctx_img = _unpatchify(ctx_p, s, H, W)
    # --- 3x3 conv + folded BN*gamma + residual + ReLU ---
    return run_conv3(ctx_img, red_img, p["w3"], p["b3"], use_pallas=use_pallas)


def cpm_forward(params, x_nchw, *, use_pallas):
    x = jnp.transpose(x_nchw, (0, 2, 3, 1)).astype(F32)          # NHWC
    B, H, W, Cin = x.shape
    N = H * W
    x_bf = x.reshape(B, N, Cin).astype(BF16)
    # conv1 + (all scales') per-patch NonLocal q/k/v projections, fused.
    red, qkv_all = run_reduce_and_project(
        x_bf, params["conv1_w"], params["conv1_b"],
        params["nl_w_all"], params["nl_b_all"], use_pallas=use_pallas)
    Cp = red.shape[-1]
    red_img = red.reshape(B, H, W, Cp)
    qkv_img_all = qkv_all.reshape(B, H, W, -1)
    K = 2 * params["ci"] + Cp

    branches = [red_img]                                         # (reduced, b0, ...)
    for idx, (s, p_s) in enumerate(zip(params["scales"], params["agcb"])):
        qkv_img = qkv_img_all[..., idx * K:(idx + 1) * K]
        branches.append(agcb_patch(red_img, qkv_img, p_s, s, use_pallas=use_pallas))
    cat = jnp.concatenate(branches, axis=-1)
    out = run_pointwise(cat.reshape(B, N, -1).astype(BF16),
                        params["conv2_w"], params["conv2_b"],
                        relu=True, use_pallas=use_pallas)
    return jnp.transpose(out.reshape(B, H, W, -1), (0, 3, 1, 2))  # back to NCHW


# --------------------------- parameter construction -------------------------

def init_params(key, planes, scales, reduce_ratios=(4, 8)):
    inter = planes // reduce_ratios[0]
    ci = max(inter // reduce_ratios[1], 1)
    keys = iter(jax.random.split(key, 256))

    def nxt():
        return next(keys)

    def lin(cin, cout, w_scale=0.2):
        w = jax.random.normal(nxt(), (cin, cout), F32) * w_scale
        b = jax.random.normal(nxt(), (1, cout), F32) * 0.05
        return w, b

    def bn_fold(cout, conv_bias):
        g = 1.0 + 0.1 * jax.random.normal(nxt(), (cout,), F32)
        beta = 0.1 * jax.random.normal(nxt(), (cout,), F32)
        mean = 0.1 * jax.random.normal(nxt(), (cout,), F32)
        var = 0.5 + jax.random.uniform(nxt(), (cout,), F32)
        scale = g / jnp.sqrt(var + EPS)
        shift = (conv_bias.reshape(-1) - mean) * scale + beta
        return scale.reshape(1, cout), shift.reshape(1, cout)

    # NOTE: PyTorch inits the gamma residual weights to 0; nonzero values are
    # used so the attention / conv paths actually contribute.
    def nonlocal_qkv(c, gamma):
        wq, bq = lin(c, ci)
        wk, bk = lin(c, ci)
        wv, bv = lin(c, c)
        w = jnp.concatenate([wq, wk, wv], axis=1)       # fused (c, 2ci + c)
        b = jnp.concatenate([bq, bk, bv], axis=1)
        return w.astype(BF16), b, gamma

    params = {"scales": tuple(scales), "ci": ci}
    # conv1: 1x1 conv + BN + ReLU; BN scale folded into the weight (bf16).
    w1, b1 = lin(planes, inter)
    s1, sh1 = bn_fold(inter, b1)
    params["conv1_w"] = (w1 * s1).astype(BF16)
    params["conv1_b"] = sh1

    agcb, nl_w_all, nl_b_all = [], [], []
    for _ in scales:
        nl_w, nl_b, nl_gamma = nonlocal_qkv(inter, 0.5)
        gca_w, gca_b, gca_gamma = nonlocal_qkv(inter, 0.3)
        nl_w_all.append(nl_w)
        nl_b_all.append(nl_b)
        w3 = jax.random.normal(nxt(), (3, 3, inter, inter), F32) * 0.1
        b3 = jax.random.normal(nxt(), (1, inter), F32) * 0.05
        sc3, sh3 = bn_fold(inter, b3)
        gamma3 = 0.25
        agcb.append(dict(
            ci=ci,
            gca_w=gca_w, gca_b=gca_b, gca_gamma=gca_gamma,
            nl_gamma=nl_gamma,
            # tap-major im2col weights; BN scale and AGCB gamma folded in.
            w3=(w3.reshape(9 * inter, inter) * (gamma3 * sc3)).astype(BF16),
            b3=gamma3 * sh3,
        ))
    params["agcb"] = agcb
    params["nl_w_all"] = jnp.concatenate(nl_w_all, axis=1)   # (inter, 4*(2ci+inter))
    params["nl_b_all"] = jnp.concatenate(nl_b_all, axis=1)

    ch = inter * (len(scales) + 1)
    w2, b2 = lin(ch, planes)
    s2, sh2 = bn_fold(planes, b2)
    params["conv2_w"] = (w2 * s2).astype(BF16)
    params["conv2_b"] = sh2
    return params


# ----------------------------------- main ------------------------------------

if __name__ == "__main__":
    key = jax.random.PRNGKey(0)
    k_x, k_p = jax.random.split(key)

    planes = 64
    scales = (3, 5, 6, 10)          # CPM defaults; H = W = 30 is divisible by all
    B, H, W = 2, 30, 30

    x = jax.random.normal(k_x, (B, planes, H, W), F32)   # NCHW, like PyTorch
    params = init_params(k_p, planes, scales)

    out = cpm_forward(params, x, use_pallas=True)
    out = jax.block_until_ready(out)
    assert out.shape == (B, planes, H, W)

    ref = cpm_forward(params, x, use_pallas=False)
    ref = jax.block_until_ready(ref)
    max_err = float(jnp.max(jnp.abs(out - ref)))
    if not bool(jnp.allclose(out, ref, rtol=1e-2, atol=1e-2)):
        raise SystemExit(f"Pallas/reference mismatch: max abs err = {max_err}")

    print("KERNEL_OK")
</pallas_src>

<mosaic_0001>
module attributes {stable_mosaic.version = 11 : i64} {
  func.func @_reduce_qkv_kernel(%arg0: i32, %arg1: memref<1x900x64xbf16, #tpu.memory_space<vmem>>, %arg2: memref<64x16xbf16, #tpu.memory_space<vmem>>, %arg3: memref<1x16xf32, #tpu.memory_space<vmem>>, %arg4: memref<16x80xbf16, #tpu.memory_space<vmem>>, %arg5: memref<1x80xf32, #tpu.memory_space<vmem>>, %arg6: memref<1x900x16xf32, #tpu.memory_space<vmem>>, %arg7: memref<1x900x80xf32, #tpu.memory_space<vmem>>) attributes {dimension_semantics = [#tpu.dimension_semantics<parallel>], iteration_bounds = array<i64: 2>, scalar_prefetch = 0 : i64, scratch_operands = 0 : i64, tpu.core_type = #tpu.core_type<tc>, window_params = [{transform_indices = @transform_0, window_bounds = array<i64: 1, 900, 64>}, {pipeline_mode = #tpu.pipeline_mode<synchronous>, transform_indices = @transform_1, window_bounds = array<i64: 64, 16>}, {pipeline_mode = #tpu.pipeline_mode<synchronous>, transform_indices = @transform_2, window_bounds = array<i64: 1, 16>}, {pipeline_mode = #tpu.pipeline_mode<synchronous>, transform_indices = @transform_3, window_bounds = array<i64: 16, 80>}, {pipeline_mode = #tpu.pipeline_mode<synchronous>, transform_indices = @transform_4, window_bounds = array<i64: 1, 80>}, {transform_indices = @transform_5, window_bounds = array<i64: 1, 900, 16>}, {transform_indices = @transform_6, window_bounds = array<i64: 1, 900, 80>}]} {
    %c0 = arith.constant 0 : index
    %c0_0 = arith.constant 0 : index
    %c0_1 = arith.constant 0 : index
    %0 = vector.load %arg1[%c0, %c0_0, %c0_1] : memref<1x900x64xbf16, #tpu.memory_space<vmem>>, vector<1x900x64xbf16>
    %1 = vector.shape_cast %0 : vector<1x900x64xbf16> to vector<900x64xbf16>
    %c0_2 = arith.constant 0 : index
    %c0_3 = arith.constant 0 : index
    %2 = vector.load %arg2[%c0_2, %c0_3] : memref<64x16xbf16, #tpu.memory_space<vmem>>, vector<64x16xbf16>
    %cst = arith.constant dense<0.000000e+00> : vector<900x16xf32>
    %3 = tpu.matmul %1, %2, %cst {dimension_numbers = #tpu.dot_dimension_numbers<[1], [0], [0], [1], [0, 0, 1, 1], [], []>} : vector<900x64xbf16>, vector<64x16xbf16>, vector<900x16xf32> -> vector<900x16xf32>
    %c0_4 = arith.constant 0 : index
    %c0_5 = arith.constant 0 : index
    %4 = vector.load %arg3[%c0_4, %c0_5] : memref<1x16xf32, #tpu.memory_space<vmem>>, vector<1x16xf32>
    %5 = vector.broadcast %4 : vector<1x16xf32> to vector<900x16xf32>
    %6 = arith.addf %3, %5 : vector<900x16xf32>
    %cst_6 = arith.constant 0.000000e+00 : f32
    %7 = vector.broadcast %cst_6 : f32 to vector<900x16xf32>
    %8 = arith.maximumf %6, %7 : vector<900x16xf32>
    %c0_7 = arith.constant 0 : index
    %c0_8 = arith.constant 0 : index
    %c0_9 = arith.constant 0 : index
    %9 = vector.load %arg6[%c0_7, %c0_8, %c0_9] : memref<1x900x16xf32, #tpu.memory_space<vmem>>, vector<1x900x16xf32>
    %10 = vector.shape_cast %9 : vector<1x900x16xf32> to vector<900x16xf32>
    %11 = vector.shape_cast %8 : vector<900x16xf32> to vector<1x900x16xf32>
    tpu.vector_store %arg6[%c0_7, %c0_8, %c0_9], %11 {strides = array<i32>} : memref<1x900x16xf32, #tpu.memory_space<vmem>>, vector<1x900x16xf32>,
    %12 = arith.truncf %8 : vector<900x16xf32> to vector<900x16xbf16>
    %c0_10 = arith.constant 0 : index
    %c0_11 = arith.constant 0 : index
    %13 = vector.load %arg4[%c0_10, %c0_11] : memref<16x80xbf16, #tpu.memory_space<vmem>>, vector<16x80xbf16>
    %cst_12 = arith.constant dense<0.000000e+00> : vector<900x80xf32>
    %14 = tpu.matmul %12, %13, %cst_12 {dimension_numbers = #tpu.dot_dimension_numbers<[1], [0], [0], [1], [0, 0, 1, 1], [], []>} : vector<900x16xbf16>, vector<16x80xbf16>, vector<900x80xf32> -> vector<900x80xf32>
    %c0_13 = arith.constant 0 : index
    %c0_14 = arith.constant 0 : index
    %15 = vector.load %arg5[%c0_13, %c0_14] : memref<1x80xf32, #tpu.memory_space<vmem>>, vector<1x80xf32>
    %16 = vector.broadcast %15 : vector<1x80xf32> to vector<900x80xf32>
    %17 = arith.addf %14, %16 : vector<900x80xf32>
    %c0_15 = arith.constant 0 : index
    %c0_16 = arith.constant 0 : index
    %c0_17 = arith.constant 0 : index
    %18 = vector.load %arg7[%c0_15, %c0_16, %c0_17] : memref<1x900x80xf32, #tpu.memory_space<vmem>>, vector<1x900x80xf32>
    %19 = vector.shape_cast %18 : vector<1x900x80xf32> to vector<900x80xf32>
    %20 = vector.shape_cast %17 : vector<900x80xf32> to vector<1x900x80xf32>
    tpu.vector_store %arg7[%c0_15, %c0_16, %c0_17], %20 {strides = array<i32>} : memref<1x900x80xf32, #tpu.memory_space<vmem>>, vector<1x900x80xf32>,
    return
  }
  func.func @transform_0(%arg0: i32) -> (i32, i32, i32) {
    %c0_i32 = arith.constant 0 : i32
    %c0_i32_0 = arith.constant 0 : i32
    %c0_i32_1 = arith.constant 0 : i32
    return %arg0, %c0_i32, %c0_i32_0 : i32, i32, i32
  }
  func.func @transform_1(%arg0: i32) -> (i32, i32) {
    %c0_i32 = arith.constant 0 : i32
    %c0_i32_0 = arith.constant 0 : i32
    %c0_i32_1 = arith.constant 0 : i32
    return %c0_i32, %c0_i32_0 : i32, i32
  }
  func.func @transform_2(%arg0: i32) -> (i32, i32) {
    %c0_i32 = arith.constant 0 : i32
    %c0_i32_0 = arith.constant 0 : i32
    %c0_i32_1 = arith.constant 0 : i32
    return %c0_i32, %c0_i32_0 : i32, i32
  }
  func.func @transform_3(%arg0: i32) -> (i32, i32) {
    %c0_i32 = arith.constant 0 : i32
    %c0_i32_0 = arith.constant 0 : i32
    %c0_i32_1 = arith.constant 0 : i32
    return %c0_i32, %c0_i32_0 : i32, i32
  }
  func.func @transform_4(%arg0: i32) -> (i32, i32) {
    %c0_i32 = arith.constant 0 : i32
    %c0_i32_0 = arith.constant 0 : i32
    %c0_i32_1 = arith.constant 0 : i32
    return %c0_i32, %c0_i32_0 : i32, i32
  }
  func.func @transform_5(%arg0: i32) -> (i32, i32, i32) {
    %c0_i32 = arith.constant 0 : i32
    %c0_i32_0 = arith.constant 0 : i32
    %c0_i32_1 = arith.constant 0 : i32
    return %arg0, %c0_i32, %c0_i32_0 : i32, i32, i32
  }
  func.func @transform_6(%arg0: i32) -> (i32, i32, i32) {
    %c0_i32 = arith.constant 0 : i32
    %c0_i32_0 = arith.constant 0 : i32
    %c0_i32_1 = arith.constant 0 : i32
    return %arg0, %c0_i32, %c0_i32_0 : i32, i32, i32
  }
}

</mosaic_0001>

<llo_original>
// kernel: tpu_custom_call.1
$region0: #{tpu_custom_call.1}
  #allocation0 [shape = 'u32[]', space=smem, size = 0x4, offset = 0x4, fixed_abs, tag = 'smem constant byte address 0x4 - core index']
  #allocation1 [shape = 'u32[144,128]{1,0:T(1,128)}', space=vmem, size = 0x12000, scoped, tag = 'internal scratch']
  %s0 = inlined_call_operand.vmem [shape: bf16[2,900,64], index: 0, kind: input, shape index: {}]
  %s1 = inlined_call_operand.vmem [shape: bf16[64,16], index: 1, kind: input, shape index: {}]
  %s2 = inlined_call_operand.vmem [shape: f32[1,16], index: 2, kind: input, shape index: {}]
  %s3 = inlined_call_operand.vmem [shape: bf16[16,80], index: 3, kind: input, shape index: {}]
  %s4 = inlined_call_operand.vmem [shape: f32[1,80], index: 4, kind: input, shape index: {}]
  %s5 = inlined_call_operand.vmem [shape: f32[2,900,16], index: 5, kind: output, shape index: {0}]
  %s6 = inlined_call_operand.vmem [shape: f32[2,900,80], index: 6, kind: output, shape index: {1}]
  %7 = xla_tuple %s5, %s6
  %s8 = sld [smem:[#allocation0]]
  $region61: #{tpu_custom_call.1} parent=0
    _
  %s10 = ssub.s32 1, %s8
  %s11 = scalar_select 0, %s10, %s8
  loop: start=0, step=1, limit=4
  $region2: #{tpu_custom_call.1} parent=0 // loop_pre_header
    _
  $region3: #{tpu_custom_call.1} parent=0 // loop_header
    %s13 = sphi 0, %s17
    %p14 = scmp.ge.s32.totalorder %s13, 4
    %s23 = sphi 0, %s25
    %s26 = sphi 0, %s23
    %s27 = sphi 0, %s26
    %s43 = sphi 0, %s27
    %s47 = sphi 0, %s47
    %s49 = sphi 0, %s47
    %s50 = sphi 0, %s49
    %s64 = sphi 0, %s50
    %s68 = sphi 0, %s68
    %s70 = sphi 0, %s68
    %s71 = sphi 0, %s70
    %s85 = sphi 0, %s71
    %s89 = sphi 0, %s89
    %s91 = sphi 0, %s89
    %s92 = sphi 0, %s91
    %s106 = sphi 0, %s92
    %s110 = sphi 0, %s110
    %s112 = sphi 0, %s110
    %s113 = sphi 0, %s112
    %s127 = sphi 0, %s113
    %s133 = sphi 0, %s135
    %s136 = sphi 0, %s133
    %s137 = sphi 0, %s136
    %s153 = sphi 0, %s137
    %s159 = sphi 0, %s161
    %s162 = sphi 0, %s159
    %s163 = sphi 0, %s162
    %s179 = sphi 0, %s163
  $region4: #{tpu_custom_call.1} parent=0 // loop_header_branch
    %16 = sbr.rel (%p14) target = $region8
  $region5: #{tpu_custom_call.1} parent=0 // loop_body
    %s18 = ssub.s32 %s13, 1
    %s19 = ssub.s32 %s13, 2
    %s20 = sadd.s32 %s13, 1
    %s21 = ssub.s32 %s13, %s20
    %p22 = scmp.eq.s32.totalorder %s21, 0
    %s24 = sadd.s32 %s23, 1
    %s25 = scalar_select %p22, %s23, %s24
    %p28 = pneg %p22
    %p29 = scmp.eq.s32.totalorder %s13, 1
    %p30 = por %p28, %p29
    %p31 = scmp.ne.s32.totalorder %s23, %s26
    %p32 = scmp.eq.s32.totalorder %s13, 0
    %p33 = por %p31, %p32
    %p34 = scmp.ne.s32.totalorder %s23, %s26
    %p35 = scmp.eq.s32.totalorder %s18, 1
    %p36 = por %p34, %p35
    %p37 = scmp.ne.s32.totalorder %s26, %s27
    %p38 = scmp.eq.s32.totalorder %s18, 0
    %p39 = por %p37, %p38
    %p40 = scmp.ne.s32.totalorder %s26, %s27
    %p41 = scmp.eq.s32.totalorder %s19, 1
    %p42 = por %p40, %p41
    %p44 = scmp.ne.s32.totalorder %s27, %s43
    %p45 = scmp.eq.s32.totalorder %s19, 0
    %p46 = por %p44, %p45
    %s48 = sadd.s32 %s47, 1
    %p51 = scmp.eq.s32.totalorder %s13, 1
    %p52 = scmp.ne.s32.totalorder %s47, %s49
    %p53 = scmp.eq.s32.totalorder %s13, 0
    %p54 = por %p52, %p53
    %p55 = scmp.ne.s32.totalorder %s47, %s49
    %p56 = scmp.eq.s32.totalorder %s18, 1
    %p57 = por %p55, %p56
    %p58 = scmp.ne.s32.totalorder %s49, %s50
    %p59 = scmp.eq.s32.totalorder %s18, 0
    %p60 = por %p58, %p59
    %p61 = scmp.ne.s32.totalorder %s49, %s50
    %p62 = scmp.eq.s32.totalorder %s19, 1
    %p63 = por %p61, %p62
    %p65 = scmp.ne.s32.totalorder %s50, %s64
    %p66 = scmp.eq.s32.totalorder %s19, 0
    %p67 = por %p65, %p66
    %s69 = sadd.s32 %s68, 1
    %p72 = scmp.eq.s32.totalorder %s13, 1
    %p73 = scmp.ne.s32.totalorder %s68, %s70
    %p74 = scmp.eq.s32.totalorder %s13, 0
    %p75 = por %p73, %p74
    %p76 = scmp.ne.s32.totalorder %s68, %s70
    %p77 = scmp.eq.s32.totalorder %s18, 1
    %p78 = por %p76, %p77
    %p79 = scmp.ne.s32.totalorder %s70, %s71
    %p80 = scmp.eq.s32.totalorder %s18, 0
    %p81 = por %p79, %p80
    %p82 = scmp.ne.s32.totalorder %s70, %s71
    %p83 = scmp.eq.s32.totalorder %s19, 1
    %p84 = por %p82, %p83
    %p86 = scmp.ne.s32.totalorder %s71, %s85
    %p87 = scmp.eq.s32.totalorder %s19, 0
    %p88 = por %p86, %p87
    %s90 = sadd.s32 %s89, 1
    %p93 = scmp.eq.s32.totalorder %s13, 1
    %p94 = scmp.ne.s32.totalorder %s89, %s91
    %p95 = scmp.eq.s32.totalorder %s13, 0
    %p96 = por %p94, %p95
    %p97 = scmp.ne.s32.totalorder %s89, %s91
    %p98 = scmp.eq.s32.totalorder %s18, 1
    %p99 = por %p97, %p98
    %p100 = scmp.ne.s32.totalorder %s91, %s92
    %p101 = scmp.eq.s32.totalorder %s18, 0
    %p102 = por %p100, %p101
    %p103 = scmp.ne.s32.totalorder %s91, %s92
    %p104 = scmp.eq.s32.totalorder %s19, 1
    %p105 = por %p103, %p104
    %p107 = scmp.ne.s32.totalorder %s92, %s106
    %p108 = scmp.eq.s32.totalorder %s19, 0
    %p109 = por %p107, %p108
    %s111 = sadd.s32 %s110, 1
    %p114 = scmp.eq.s32.totalorder %s13, 1
    %p115 = scmp.ne.s32.totalorder %s110, %s112
    %p116 = scmp.eq.s32.totalorder %s13, 0
    %p117 = por %p115, %p116
    %p118 = scmp.ne.s32.totalorder %s110, %s112
    %p119 = scmp.eq.s32.totalorder %s18, 1
    %p120 = por %p118, %p119
    %p121 = scmp.ne.s32.totalorder %s112, %s113
    %p122 = scmp.eq.s32.totalorder %s18, 0
    %p123 = por %p121, %p122
    %p124 = scmp.ne.s32.totalorder %s112, %s113
    %p125 = scmp.eq.s32.totalorder %s19, 1
    %p126 = por %p124, %p125
    %p128 = scmp.ne.s32.totalorder %s113, %s127
    %p129 = scmp.eq.s32.totalorder %s19, 0
    %p130 = por %p128, %p129
    %s131 = ssub.s32 %s13, %s20
    %p132 = scmp.eq.s32.totalorder %s131, 0
    %s134 = sadd.s32 %s133, 1
    %s135 = scalar_select %p132, %s133, %s134
    %p138 = pneg %p132
    %p139 = scmp.eq.s32.totalorder %s13, 1
    %p140 = por %p138, %p139
    %p141 = scmp.ne.s32.totalorder %s133, %s136
    %p142 = scmp.eq.s32.totalorder %s13, 0
    %p143 = por %p141, %p142
    %p144 = scmp.ne.s32.totalorder %s133, %s136
    %p145 = scmp.eq.s32.totalorder %s18, 1
    %p146 = por %p144, %p145
    %p147 = scmp.ne.s32.totalorder %s136, %s137
    %p148 = scmp.eq.s32.totalorder %s18, 0
    %p149 = por %p147, %p148
    %p150 = scmp.ne.s32.totalorder %s136, %s137
    %p151 = scmp.eq.s32.totalorder %s19, 1
    %p152 = por %p150, %p151
    %p154 = scmp.ne.s32.totalorder %s137, %s153
    %p155 = scmp.eq.s32.totalorder %s19, 0
    %p156 = por %p154, %p155
    %s157 = ssub.s32 %s13, %s20
    %p158 = scmp.eq.s32.totalorder %s157, 0
    %s160 = sadd.s32 %s159, 1
    %s161 = scalar_select %p158, %s159, %s160
    %p164 = pneg %p158
    %p165 = scmp.eq.s32.totalorder %s13, 1
    %p166 = por %p164, %p165
    %p167 = scmp.ne.s32.totalorder %s159, %s162
    %p168 = scmp.eq.s32.totalorder %s13, 0
    %p169 = por %p167, %p168
    %p170 = scmp.ne.s32.totalorder %s159, %s162
    %p171 = scmp.eq.s32.totalorder %s18, 1
    %p172 = por %p170, %p171
    %p173 = scmp.ne.s32.totalorder %s162, %s163
    %p174 = scmp.eq.s32.totalorder %s18, 0
    %p175 = por %p173, %p174
    %p176 = scmp.ne.s32.totalorder %s162, %s163
    %p177 = scmp.eq.s32.totalorder %s19, 1
    %p178 = por %p176, %p177
    %p180 = scmp.ne.s32.totalorder %s163, %s179
    %p181 = scmp.eq.s32.totalorder %s19, 0
    %p182 = por %p180, %p181
    %p183 = scmp.le.s32.totalorder 1, %s13
    %p184 = scmp.lt.s32.totalorder %s13, 3
    %p185 = pnand %p183, %p184
    %p186 = pneg %p185
    // Predicated region
    $region9: #{tpu_custom_call.1} parent=5 // pred_check
      _
    $region10: #{tpu_custom_call.1} parent=5 // pred_check_branch
      %188 = sbr.rel (%p185) target = $region12
    $region11: #{tpu_custom_call.1} parent=5 // pred_region
      %s189 = ssub.s32 %s13, 1
      // Predicated region
      $region13: #{tpu_custom_call.1} parent=11 // pred_check
        %p190 = pneg %p60
      $region14: #{tpu_custom_call.1} parent=11 // pred_check_branch
        %192 = sbr.rel (%p190) target = $region16
      $region15: #{tpu_custom_call.1} parent=11 // pred_region
        _
      $region16: #{tpu_custom_call.1} parent=11 // pred_fallthru
        _
      // Predicated region
      $region17: #{tpu_custom_call.1} parent=11 // pred_check
        %p193 = pneg %p81
      $region18: #{tpu_custom_call.1} parent=11 // pred_check_branch
        %195 = sbr.rel (%p193) target = $region20
      $region19: #{tpu_custom_call.1} parent=11 // pred_region
        _
      $region20: #{tpu_custom_call.1} parent=11 // pred_fallthru
        _
      // Predicated region
      $region21: #{tpu_custom_call.1} parent=11 // pred_check
        %p196 = pneg %p102
      $region22: #{tpu_custom_call.1} parent=11 // pred_check_branch
        %198 = sbr.rel (%p196) target = $region24
      $region23: #{tpu_custom_call.1} parent=11 // pred_region
        _
      $region24: #{tpu_custom_call.1} parent=11 // pred_fallthru
        _
      // Predicated region
      $region25: #{tpu_custom_call.1} parent=11 // pred_check
        %p199 = pneg %p123
      $region26: #{tpu_custom_call.1} parent=11 // pred_check_branch
        %201 = sbr.rel (%p199) target = $region28
      $region27: #{tpu_custom_call.1} parent=11 // pred_region
        _
      $region28: #{tpu_custom_call.1} parent=11 // pred_fallthru
        _
    $region12: #{tpu_custom_call.1} parent=5 // pred_fallthru
      _
    %p202 = scmp.lt.s32.totalorder %s13, 2
    // Predicated region
    $region29: #{tpu_custom_call.1} parent=5 // pred_check
      %p203 = pneg %p202
    $region30: #{tpu_custom_call.1} parent=5 // pred_check_branch
      %205 = sbr.rel (%p203) target = $region32
    $region31: #{tpu_custom_call.1} parent=5 // pred_region
      // Predicated region
      $region33: #{tpu_custom_call.1} parent=31 // pred_check
        %p206 = pneg %p33
      $region34: #{tpu_custom_call.1} parent=31 // pred_check_branch
        %208 = sbr.rel (%p206) target = $region36
      $region35: #{tpu_custom_call.1} parent=31 // pred_region
        %p209 = scmp.lt.s32.totalorder %s13, 1
        %s210 = scalar_select %p209, %s13, 1
        %s211 = smul.addr %s210, 113
        %s212 = smul.addr %s211, 4
        %s213 = scalar_lea.vmem %s0, %s212
      $region36: #{tpu_custom_call.1} parent=31 // pred_fallthru
        _
    $region32: #{tpu_custom_call.1} parent=5 // pred_fallthru
      _
    %p214 = scmp.le.s32.totalorder 1, %s13
    %p215 = scmp.lt.s32.totalorder %s13, 3
    %p216 = pnand %p214, %p215
    %p217 = pneg %p216
    // Predicated region
    $region37: #{tpu_custom_call.1} parent=5 // pred_check
      _
    $region38: #{tpu_custom_call.1} parent=5 // pred_check_branch
      %219 = sbr.rel (%p216) target = $region40
    $region39: #{tpu_custom_call.1} parent=5 // pred_region
      %s220 = ssub.s32 %s13, 1
      %p221 = scmp.lt.s32.totalorder %s18, 1
      %s222 = scalar_select %p221, %s18, 1
      %s223 = smul.addr %s222, 113
      %s224 = smul.addr %s223, 4
      %s225 = scalar_lea.vmem %s0, %s224
      %p226 = pneg %p39
      %p227 = pneg %p36
      %p228 = pneg %p60
      %p229 = pneg %p57
      %p230 = pneg %p81
      %p231 = pneg %p78
      %p232 = pneg %p102
      %p233 = pneg %p99
      %p234 = pneg %p123
      %p235 = pneg %p120
      %p236 = pneg %p149
      %p237 = pneg %p146
      %p238 = scmp.lt.s32.totalorder %s18, 1
      %s239 = scalar_select %p238, %s18, 1
      %s240 = smul.addr %s239, 113
      %s241 = smul.addr %s240, 8
      %s242 = scalar_lea.vmem %s5, %s241
      %p243 = pneg %p175
      %p244 = pneg %p172
      %p245 = scmp.lt.s32.totalorder %s18, 1
      %s246 = scalar_select %p245, %s18, 1
      %s247 = smul.addr %s246, 113
      %s248 = smul.addr %s247, 8
      %s249 = scalar_lea.vmem %s6, %s248
      %p250 = scmp.lt.s32.totalorder %s18, 1
      %s251 = scalar_select %p250, %s18, 1
      %s252 = smul.addr %s251, 113
      %s253 = smul.addr %s252, 4
      %s254 = scalar_lea.vmem %s0, %s253
      %p255 = scmp.lt.s32.totalorder %s18, 1
      %s256 = scalar_select %p255, %s18, 1
      %s257 = smul.addr %s256, 113
      %s258 = smul.addr %s257, 8
      %s259 = scalar_lea.vmem %s5, %s258
      %p260 = scmp.lt.s32.totalorder %s18, 1
      %s261 = scalar_select %p260, %s18, 1
      %s262 = smul.addr %s261, 113
      %s263 = smul.addr %s262, 8
      %s264 = scalar_lea.vmem %s6, %s263
      %v266 = vld [vmem:[%s254] sm:$0xf]
      %v267 = vld [vmem:[%s254 + $0x4] sm:$0xf]
      %v268 = vld [vmem:[%s254 + $0x8] sm:$0xf]
      %v269 = vld [vmem:[%s254 + $0xc] sm:$0xf]
      %v270 = vld [vmem:[%s254 + $0x10] sm:$0xf]
      %v271 = vld [vmem:[%s254 + $0x14] sm:$0xf]
      %v272 = vld [vmem:[%s254 + $0x18] sm:$0xf]
      %v273 = vld [vmem:[%s254 + $0x1c] sm:$0xf]
      %v274 = vld [vmem:[%s254 + $0x20] sm:$0xf]
      %v275 = vld [vmem:[%s254 + $0x24] sm:$0xf]
      %v276 = vld [vmem:[%s254 + $0x28] sm:$0xf]
      %v277 = vld [vmem:[%s254 + $0x2c] sm:$0xf]
      %v278 = vld [vmem:[%s254 + $0x30] sm:$0xf]
      %v279 = vld [vmem:[%s254 + $0x34] sm:$0xf]
      %v280 = vld [vmem:[%s254 + $0x38] sm:$0xf]
      %v281 = vld [vmem:[%s254 + $0x3c] sm:$0xf]
      %v282 = vld [vmem:[%s254 + $0x40] sm:$0xf]
      %v283 = vld [vmem:[%s254 + $0x44] sm:$0xf]
      %v284 = vld [vmem:[%s254 + $0x48] sm:$0xf]
      %v285 = vld [vmem:[%s254 + $0x4c] sm:$0xf]
      %v286 = vld [vmem:[%s254 + $0x50] sm:$0xf]
      %v287 = vld [vmem:[%s254 + $0x54] sm:$0xf]
      %v288 = vld [vmem:[%s254 + $0x58] sm:$0xf]
      %v289 = vld [vmem:[%s254 + $0x5c] sm:$0xf]
      %v290 = vld [vmem:[%s254 + $0x60] sm:$0xf]
      %v291 = vld [vmem:[%s254 + $0x64] sm:$0xf]
      %v292 = vld [vmem:[%s254 + $0x68] sm:$0xf]
      %v293 = vld [vmem:[%s254 + $0x6c] sm:$0xf]
      %v294 = vld [vmem:[%s254 + $0x70] sm:$0xf]
      %v295 = vld [vmem:[%s254 + $0x74] sm:$0xf]
      %v296 = vld [vmem:[%s254 + $0x78] sm:$0xf]
      %v297 = vld [vmem:[%s254 + $0x7c] sm:$0xf]
      %v298 = vld [vmem:[%s254 + $0x80] sm:$0xf]
      %v299 = vld [vmem:[%s254 + $0x84] sm:$0xf]
      %v300 = vld [vmem:[%s254 + $0x88] sm:$0xf]
      %v301 = vld [vmem:[%s254 + $0x8c] sm:$0xf]
      %v302 = vld [vmem:[%s254 + $0x90] sm:$0xf]
      %v303 = vld [vmem:[%s254 + $0x94] sm:$0xf]
      %v304 = vld [vmem:[%s254 + $0x98] sm:$0xf]
      %v305 = vld [vmem:[%s254 + $0x9c] sm:$0xf]
      %v306 = vld [vmem:[%s254 + $0xa0] sm:$0xf]
      %v307 = vld [vmem:[%s254 + $0xa4] sm:$0xf]
      %v308 = vld [vmem:[%s254 + $0xa8] sm:$0xf]
      %v309 = vld [vmem:[%s254 + $0xac] sm:$0xf]
      %v310 = vld [vmem:[%s254 + $0xb0] sm:$0xf]
      %v311 = vld [vmem:[%s254 + $0xb4] sm:$0xf]
      %v312 = vld [vmem:[%s254 + $0xb8] sm:$0xf]
      %v313 = vld [vmem:[%s254 + $0xbc] sm:$0xf]
      %v314 = vld [vmem:[%s254 + $0xc0] sm:$0xf]
      %v315 = vld [vmem:[%s254 + $0xc4] sm:$0xf]
      %v316 = vld [vmem:[%s254 + $0xc8] sm:$0xf]
      %v317 = vld [vmem:[%s254 + $0xcc] sm:$0xf]
      %v318 = vld [vmem:[%s254 + $0xd0] sm:$0xf]
      %v319 = vld [vmem:[%s254 + $0xd4] sm:$0xf]
      %v320 = vld [vmem:[%s254 + $0xd8] sm:$0xf]
      %v321 = vld [vmem:[%s254 + $0xdc] sm:$0xf]
      %v322 = vld [vmem:[%s254 + $0xe0] sm:$0xf]
      %v323 = vld [vmem:[%s254 + $0xe4] sm:$0xf]
      %v324 = vld [vmem:[%s254 + $0xe8] sm:$0xf]
      %v325 = vld [vmem:[%s254 + $0xec] sm:$0xf]
      %v326 = vld [vmem:[%s254 + $0xf0] sm:$0xf]
      %v327 = vld [vmem:[%s254 + $0xf4] sm:$0xf]
      %v328 = vld [vmem:[%s254 + $0xf8] sm:$0xf]
      %v329 = vld [vmem:[%s254 + $0xfc] sm:$0xf]
      %v330 = vld [vmem:[%s254 + $0x100] sm:$0xf]
      %v331 = vld [vmem:[%s254 + $0x104] sm:$0xf]
      %v332 = vld [vmem:[%s254 + $0x108] sm:$0xf]
      %v333 = vld [vmem:[%s254 + $0x10c] sm:$0xf]
      %v334 = vld [vmem:[%s254 + $0x110] sm:$0xf]
      %v335 = vld [vmem:[%s254 + $0x114] sm:$0xf]
      %v336 = vld [vmem:[%s254 + $0x118] sm:$0xf]
      %v337 = vld [vmem:[%s254 + $0x11c] sm:$0xf]
      %v338 = vld [vmem:[%s254 + $0x120] sm:$0xf]
      %v339 = vld [vmem:[%s254 + $0x124] sm:$0xf]
      %v340 = vld [vmem:[%s254 + $0x128] sm:$0xf]
      %v341 = vld [vmem:[%s254 + $0x12c] sm:$0xf]
      %v342 = vld [vmem:[%s254 + $0x130] sm:$0xf]
      %v343 = vld [vmem:[%s254 + $0x134] sm:$0xf]
      %v344 = vld [vmem:[%s254 + $0x138] sm:$0xf]
      %v345 = vld [vmem:[%s254 + $0x13c] sm:$0xf]
      %v346 = vld [vmem:[%s254 + $0x140] sm:$0xf]
      %v347 = vld [vmem:[%s254 + $0x144] sm:$0xf]
      %v348 = vld [vmem:[%s254 + $0x148] sm:$0xf]
      %v349 = vld [vmem:[%s254 + $0x14c] sm:$0xf]
      %v350 = vld [vmem:[%s254 + $0x150] sm:$0xf]
      %v351 = vld [vmem:[%s254 + $0x154] sm:$0xf]
      %v352 = vld [vmem:[%s254 + $0x158] sm:$0xf]
      %v353 = vld [vmem:[%s254 + $0x15c] sm:$0xf]
      %v354 = vld [vmem:[%s254 + $0x160] sm:$0xf]
      %v355 = vld [vmem:[%s254 + $0x164] sm:$0xf]
      %v356 = vld [vmem:[%s254 + $0x168] sm:$0xf]
      %v357 = vld [vmem:[%s254 + $0x16c] sm:$0xf]
      %v358 = vld [vmem:[%s254 + $0x170] sm:$0xf]
      %v359 = vld [vmem:[%s254 + $0x174] sm:$0xf]
      %v360 = vld [vmem:[%s254 + $0x178] sm:$0xf]
      %v361 = vld [vmem:[%s254 + $0x17c] sm:$0xf]
      %v362 = vld [vmem:[%s254 + $0x180] sm:$0xf]
      %v363 = vld [vmem:[%s254 + $0x184] sm:$0xf]
      %v364 = vld [vmem:[%s254 + $0x188] sm:$0xf]
      %v365 = vld [vmem:[%s254 + $0x18c] sm:$0xf]
      %v366 = vld [vmem:[%s254 + $0x190] sm:$0xf]
      %v367 = vld [vmem:[%s254 + $0x194] sm:$0xf]
      %v368 = vld [vmem:[%s254 + $0x198] sm:$0xf]
      %v369 = vld [vmem:[%s254 + $0x19c] sm:$0xf]
      %v370 = vld [vmem:[%s254 + $0x1a0] sm:$0xf]
      %v371 = vld [vmem:[%s254 + $0x1a4] sm:$0xf]
      %v372 = vld [vmem:[%s254 + $0x1a8] sm:$0xf]
      %v373 = vld [vmem:[%s254 + $0x1ac] sm:$0xf]
      %v374 = vld [vmem:[%s254 + $0x1b0] sm:$0xf]
      %v375 = vld [vmem:[%s254 + $0x1b4] sm:$0xf]
      %v376 = vld [vmem:[%s254 + $0x1b8] sm:$0xf]
      %v377 = vld [vmem:[%s254 + $0x1bc] sm:$0xf]
      %v378 = vld [vmem:[%s254 + $0x1c0] sm:$0x3]
      %v379 = vld [vmem:[%s1] sm:$0xf]
      %v380 = vld [vmem:[%s1 + $0x4] sm:$0xf]
      %v381 = vld [vmem:[%s1 + $0x8] sm:$0xf]
      %v382 = vld [vmem:[%s1 + $0xc] sm:$0xf]
      %v383 = vld [vmem:[%s1 + $0x10] sm:$0xf]
      %v384 = vld [vmem:[%s1 + $0x14] sm:$0xf]
      %v385 = vld [vmem:[%s1 + $0x18] sm:$0xf]
      %v386 = vld [vmem:[%s1 + $0x1c] sm:$0xf]
      %v387 = vld [vmem:[%s2] sm:$0x1]
      %v389 = vlaneseq
      %v390 = vshrl.u32 %v389, 7
      %v391 = vsub.s32 0, %v390
      %v392 = vrot.slane %v387, %v391
      %v507 = vunpack.c.l.b16 %v266
      %v508 = vunpack.c.l.b16 %v267
      %v509 = vunpack.c.l.b16 %v268
      %v510 = vunpack.c.l.b16 %v269
      %v511 = vunpack.c.l.b16 %v270
      %v512 = vunpack.c.l.b16 %v271
      %v513 = vunpack.c.l.b16 %v272
      %v514 = vunpack.c.l.b16 %v273
      %v515 = vunpack.c.l.b16 %v274
      %v516 = vunpack.c.l.b16 %v275
      %v517 = vunpack.c.l.b16 %v276
      %v518 = vunpack.c.l.b16 %v277
      %v519 = vunpack.c.l.b16 %v278
      %v520 = vunpack.c.l.b16 %v279
      %v521 = vunpack.c.l.b16 %v280
      %v522 = vunpack.c.l.b16 %v281
      %v523 = vunpack.c.l.b16 %v282
      %v524 = vunpack.c.l.b16 %v283
      %v525 = vunpack.c.l.b16 %v284
      %v526 = vunpack.c.l.b16 %v285
      %v527 = vunpack.c.l.b16 %v286
      %v528 = vunpack.c.l.b16 %v287
      %v529 = vunpack.c.l.b16 %v288
      %v530 = vunpack.c.l.b16 %v289
      %v531 = vunpack.c.l.b16 %v290
      %v532 = vunpack.c.l.b16 %v291
      %v533 = vunpack.c.l.b16 %v292
      %v534 = vunpack.c.l.b16 %v293
      %v535 = vunpack.c.l.b16 %v294
      %v536 = vunpack.c.l.b16 %v295
      %v537 = vunpack.c.l.b16 %v296
      %v538 = vunpack.c.l.b16 %v297
      %v539 = vunpack.c.l.b16 %v298
      %v540 = vunpack.c.l.b16 %v299
      %v541 = vunpack.c.l.b16 %v300
      %v542 = vunpack.c.l.b16 %v301
      %v543 = vunpack.c.l.b16 %v302
      %v544 = vunpack.c.l.b16 %v303
      %v545 = vunpack.c.l.b16 %v304
      %v546 = vunpack.c.l.b16 %v305
      %v547 = vunpack.c.l.b16 %v306
      %v548 = vunpack.c.l.b16 %v307
      %v549 = vunpack.c.l.b16 %v308
      %v550 = vunpack.c.l.b16 %v309
      %v551 = vunpack.c.l.b16 %v310
      %v552 = vunpack.c.l.b16 %v311
      %v553 = vunpack.c.l.b16 %v312
      %v554 = vunpack.c.l.b16 %v313
      %v555 = vunpack.c.l.b16 %v314
      %v556 = vunpack.c.l.b16 %v315
      %v557 = vunpack.c.l.b16 %v316
      %v558 = vunpack.c.l.b16 %v317
      %v559 = vunpack.c.l.b16 %v318
      %v560 = vunpack.c.l.b16 %v319
      %v561 = vunpack.c.l.b16 %v320
      %v562 = vunpack.c.l.b16 %v321
      %v563 = vunpack.c.l.b16 %v322
      %v564 = vunpack.c.l.b16 %v323
      %v565 = vunpack.c.l.b16 %v324
      %v566 = vunpack.c.l.b16 %v325
      %v567 = vunpack.c.l.b16 %v326
      %v568 = vunpack.c.l.b16 %v327
      %v569 = vunpack.c.l.b16 %v328
      %v570 = vunpack.c.l.b16 %v329
      %v571 = vunpack.c.l.b16 %v330
      %v572 = vunpack.c.l.b16 %v331
      %v573 = vunpack.c.l.b16 %v332
      %v574 = vunpack.c.l.b16 %v333
      %v575 = vunpack.c.l.b16 %v334
      %v576 = vunpack.c.l.b16 %v335
      %v577 = vunpack.c.l.b16 %v336
      %v578 = vunpack.c.l.b16 %v337
      %v579 = vunpack.c.l.b16 %v338
      %v580 = vunpack.c.l.b16 %v339
      %v581 = vunpack.c.l.b16 %v340
      %v582 = vunpack.c.l.b16 %v341
      %v583 = vunpack.c.l.b16 %v342
      %v584 = vunpack.c.l.b16 %v343
      %v585 = vunpack.c.l.b16 %v344
      %v586 = vunpack.c.l.b16 %v345
      %v587 = vunpack.c.l.b16 %v346
      %v588 = vunpack.c.l.b16 %v347
      %v589 = vunpack.c.l.b16 %v348
      %v590 = vunpack.c.l.b16 %v349
      %v591 = vunpack.c.l.b16 %v350
      %v592 = vunpack.c.l.b16 %v351
      %v593 = vunpack.c.l.b16 %v352
      %v594 = vunpack.c.l.b16 %v353
      %v595 = vunpack.c.l.b16 %v354
      %v596 = vunpack.c.l.b16 %v355
      %v597 = vunpack.c.l.b16 %v356
      %v598 = vunpack.c.l.b16 %v357
      %v599 = vunpack.c.l.b16 %v358
      %v600 = vunpack.c.l.b16 %v359
      %v601 = vunpack.c.l.b16 %v360
      %v602 = vunpack.c.l.b16 %v361
      %v603 = vunpack.c.l.b16 %v362
      %v604 = vunpack.c.l.b16 %v363
      %v605 = vunpack.c.l.b16 %v364
      %v606 = vunpack.c.l.b16 %v365
      %v607 = vunpack.c.l.b16 %v366
      %v608 = vunpack.c.l.b16 %v367
      %v609 = vunpack.c.l.b16 %v368
      %v610 = vunpack.c.l.b16 %v369
      %v611 = vunpack.c.l.b16 %v370
      %v612 = vunpack.c.l.b16 %v371
      %v613 = vunpack.c.l.b16 %v372
      %v614 = vunpack.c.l.b16 %v373
      %v615 = vunpack.c.l.b16 %v374
      %v616 = vunpack.c.l.b16 %v375
      %v617 = vunpack.c.l.b16 %v376
      %v618 = vunpack.c.l.b16 %v377
      %v619 = vunpack.c.l.b16 %v378
      %v620 = vpack.c.b16 %v508, %v507
      %v621 = vpack.c.b16 %v510, %v509
      %v622 = vpack.c.b16 %v512, %v511
      %v623 = vpack.c.b16 %v514, %v513
      %v624 = vpack.c.b16 %v516, %v515
      %v625 = vpack.c.b16 %v518, %v517
      %v626 = vpack.c.b16 %v520, %v519
      %v627 = vpack.c.b16 %v522, %v521
      %v628 = vpack.c.b16 %v524, %v523
      %v629 = vpack.c.b16 %v526, %v525
      %v630 = vpack.c.b16 %v528, %v527
      %v631 = vpack.c.b16 %v530, %v529
      %v632 = vpack.c.b16 %v532, %v531
      %v633 = vpack.c.b16 %v534, %v533
      %v634 = vpack.c.b16 %v536, %v535
      %v635 = vpack.c.b16 %v538, %v537
      %v636 = vpack.c.b16 %v540, %v539
      %v637 = vpack.c.b16 %v542, %v541
      %v638 = vpack.c.b16 %v544, %v543
      %v639 = vpack.c.b16 %v546, %v545
      %v640 = vpack.c.b16 %v548, %v547
      %v641 = vpack.c.b16 %v550, %v549
      %v642 = vpack.c.b16 %v552, %v551
      %v643 = vpack.c.b16 %v554, %v553
      %v644 = vpack.c.b16 %v556, %v555
      %v645 = vpack.c.b16 %v558, %v557
      %v646 = vpack.c.b16 %v560, %v559
      %v647 = vpack.c.b16 %v562, %v561
      %v648 = vpack.c.b16 %v564, %v563
      %v649 = vpack.c.b16 %v566, %v565
      %v650 = vpack.c.b16 %v568, %v567
      %v651 = vpack.c.b16 %v570, %v569
      %v652 = vpack.c.b16 %v572, %v571
      %v653 = vpack.c.b16 %v574, %v573
      %v654 = vpack.c.b16 %v576, %v575
      %v655 = vpack.c.b16 %v578, %v577
      %v656 = vpack.c.b16 %v580, %v579
      %v657 = vpack.c.b16 %v582, %v581
      %v658 = vpack.c.b16 %v584, %v583
      %v659 = vpack.c.b16 %v586, %v585
      %v660 = vpack.c.b16 %v588, %v587
      %v661 = vpack.c.b16 %v590, %v589
      %v662 = vpack.c.b16 %v592, %v591
      %v663 = vpack.c.b16 %v594, %v593
      %v664 = vpack.c.b16 %v596, %v595
      %v665 = vpack.c.b16 %v598, %v597
      %v666 = vpack.c.b16 %v600, %v599
      %v667 = vpack.c.b16 %v602, %v601
      %v668 = vpack.c.b16 %v604, %v603
      %v669 = vpack.c.b16 %v606, %v605
      %v670 = vpack.c.b16 %v608, %v607
      %v671 = vpack.c.b16 %v610, %v609
      %v672 = vpack.c.b16 %v612, %v611
      %v673 = vpack.c.b16 %v614, %v613
      %v674 = vpack.c.b16 %v616, %v615
      %v675 = vpack.c.b16 %v618, %v617
      %v676 = vpack.c.b16 %v619, %v619
      %v685 = vunpack.c.l.b16 %v379
      %v686 = vunpack.c.l.b16 %v380
      %v687 = vunpack.c.l.b16 %v381
      %v688 = vunpack.c.l.b16 %v382
      %v689 = vunpack.c.l.b16 %v383
      %v690 = vunpack.c.l.b16 %v384
      %v691 = vunpack.c.l.b16 %v385
      %v692 = vunpack.c.l.b16 %v386
      %v693 = vpack.c.b16 %v686, %v685
      %v694 = vpack.c.b16 %v688, %v687
      %v695 = vpack.c.b16 %v690, %v689
      %v696 = vpack.c.b16 %v692, %v691
      %vm701 = vcmask 523264
      %v703 = vsel %vm701, %v620, 0
      %v706 = vsel %vm701, %v621, 0
      %v709 = vsel %vm701, %v622, 0
      %v712 = vsel %vm701, %v623, 0
      %v715 = vsel %vm701, %v624, 0
      %v718 = vsel %vm701, %v625, 0
      %v721 = vsel %vm701, %v626, 0
      %v724 = vsel %vm701, %v627, 0
      %v727 = vsel %vm701, %v628, 0
      %v730 = vsel %vm701, %v629, 0
      %v733 = vsel %vm701, %v630, 0
      %v736 = vsel %vm701, %v631, 0
      %v739 = vsel %vm701, %v632, 0
      %v742 = vsel %vm701, %v633, 0
      %v745 = vsel %vm701, %v634, 0
      %v748 = vsel %vm701, %v635, 0
      %v751 = vsel %vm701, %v636, 0
      %v754 = vsel %vm701, %v637, 0
      %v757 = vsel %vm701, %v638, 0
      %v760 = vsel %vm701, %v639, 0
      %v763 = vsel %vm701, %v640, 0
      %v766 = vsel %vm701, %v641, 0
      %v769 = vsel %vm701, %v642, 0
      %v772 = vsel %vm701, %v643, 0
      %v775 = vsel %vm701, %v644, 0
      %v778 = vsel %vm701, %v645, 0
      %v781 = vsel %vm701, %v646, 0
      %v784 = vsel %vm701, %v647, 0
      %v787 = vsel %vm701, %v648, 0
      %v790 = vsel %vm701, %v649, 0
      %v793 = vsel %vm701, %v650, 0
      %v796 = vsel %vm701, %v651, 0
      %v799 = vsel %vm701, %v652, 0
      %v802 = vsel %vm701, %v653, 0
      %v805 = vsel %vm701, %v654, 0
      %v808 = vsel %vm701, %v655, 0
      %v811 = vsel %vm701, %v656, 0
      %v814 = vsel %vm701, %v657, 0
      %v817 = vsel %vm701, %v658, 0
      %v820 = vsel %vm701, %v659, 0
      %v823 = vsel %vm701, %v660, 0
      %v826 = vsel %vm701, %v661, 0
      %v829 = vsel %vm701, %v662, 0
      %v832 = vsel %vm701, %v663, 0
      %v835 = vsel %vm701, %v664, 0
      %v838 = vsel %vm701, %v665, 0
      %v841 = vsel %vm701, %v666, 0
      %v844 = vsel %vm701, %v667, 0
      %v847 = vsel %vm701, %v668, 0
      %v850 = vsel %vm701, %v669, 0
      %v853 = vsel %vm701, %v670, 0
      %v856 = vsel %vm701, %v671, 0
      %v859 = vsel %vm701, %v672, 0
      %v862 = vsel %vm701, %v673, 0
      %v865 = vsel %vm701, %v674, 0
      %v868 = vsel %vm701, %v675, 0
      %v871 = vsel %vm701, %v676, 0
      %873 = vmatprep.subr.bf16.mxu0 0
      %874 = vmatpush1.bf16.msra.mxu0 %v693
      %875 = vmatprep.subr.bf16.mxu0 0
      %876 = vmatpush1.bf16.msra.mxu0 %v694
      %877 = vmatprep.subr.bf16.mxu0 0
      %878 = vmatpush1.bf16.msra.mxu0 %v695
      %879 = vmatprep.subr.bf16.mxu0 0
      %880 = vmatpush1.bf16.msra.mxu0 %v696
      %881 = vmatprep.subr.bf16.mxu0 0
      %882 = vmatpush1.bf16.msra.mxu0 0
      %883 = vmatprep.subr.bf16.mxu0 0
      %884 = vmatpush1.bf16.msra.mxu0 0
      %885 = vmatprep.subr.bf16.mxu0 0
      %886 = vmatpush1.bf16.msra.mxu0 0
      %887 = vmatprep.subr.bf16.mxu0 0
      %888 = vmatpush1.bf16.msra.mxu0 0
      %889 = vmatprep.subr.bf16.mxu0 0
      %890 = vmatpush1.bf16.msra.mxu0 0
      %891 = vmatprep.subr.bf16.mxu0 0
      %892 = vmatpush1.bf16.msra.mxu0 0
      %893 = vmatprep.subr.bf16.mxu0 0
      %894 = vmatpush1.bf16.msra.mxu0 0
      %895 = vmatprep.subr.bf16.mxu0 0
      %896 = vmatpush1.bf16.msra.mxu0 0
      %897 = vmatprep.subr.bf16.mxu0 0
      %898 = vmatpush1.bf16.msra.mxu0 0
      %899 = vmatprep.subr.bf16.mxu0 0
      %900 = vmatpush1.bf16.msra.mxu0 0
      %901 = vmatprep.subr.bf16.mxu0 0
      %902 = vmatpush1.bf16.msra.mxu0 0
      %903 = vmatprep.subr.bf16.mxu0 0
      %904 = vmatpush1.bf16.msra.mxu0 0
      %905 = vmatprep.mubr.bf16.mxu0 0
      %906 = vmatmul.mubr.bf16.gmra.mrb[0].mxu0 %v703
      %v907 = vpop.f32.mrb[0].mxu0
      %v908 = vadd.f32 %v392, %v907
      %v909 = vpop.f32.mrb[0].mxu0
      %v910 = vpop.f32.mrb[0].mxu0
      %v911 = vadd.f32 %v392, %v910
      %v912 = vpop.f32.mrb[0].mxu0
      %913 = vmatprep.mubr.bf16.mxu0 0
      %914 = vmatmul.mubr.bf16.gmra.mrb[0].mxu0 %v706
      %v915 = vpop.f32.mrb[0].mxu0
      %v916 = vadd.f32 %v392, %v915
      %v917 = vpop.f32.mrb[0].mxu0
      %v918 = vpop.f32.mrb[0].mxu0
      %v919 = vadd.f32 %v392, %v918
      %v920 = vpop.f32.mrb[0].mxu0
      %921 = vmatprep.mubr.bf16.mxu0 0
      %922 = vmatmul.mubr.bf16.gmra.mrb[0].mxu0 %v709
      %v923 = vpop.f32.mrb[0].mxu0
      %v924 = vadd.f32 %v392, %v923
      %v925 = vpop.f32.mrb[0].mxu0
      %v926 = vpop.f32.mrb[0].mxu0
      %v927 = vadd.f32 %v392, %v926
      %v928 = vpop.f32.mrb[0].mxu0
      %929 = vmatprep.mubr.bf16.mxu0 0
      %930 = vmatmul.mubr.bf16.gmra.mrb[0].mxu0 %v712
      %v931 = vpop.f32.mrb[0].mxu0
      %v932 = vadd.f32 %v392, %v931
      %v933 = vpop.f32.mrb[0].mxu0
      %v934 = vpop.f32.mrb[0].mxu0
      %v935 = vadd.f32 %v392, %v934
      %v936 = vpop.f32.mrb[0].mxu0
      %937 = vmatprep.mubr.bf16.mxu0 0
      %938 = vmatmul.mubr.bf16.gmra.mrb[0].mxu0 %v715
      %v939 = vpop.f32.mrb[0].mxu0
      %v940 = vadd.f32 %v392, %v939
      %v941 = vpop.f32.mrb[0].mxu0
      %v942 = vpop.f32.mrb[0].mxu0
      %v943 = vadd.f32 %v392, %v942
      %v944 = vpop.f32.mrb[0].mxu0
      %945 = vmatprep.mubr.bf16.mxu0 0
      %946 = vmatmul.mubr.bf16.gmra.mrb[0].mxu0 %v718
      %v947 = vpop.f32.mrb[0].mxu0
      %v948 = vadd.f32 %v392, %v947
      %v949 = vpop.f32.mrb[0].mxu0
      %v950 = vpop.f32.mrb[0].mxu0
      %v951 = vadd.f32 %v392, %v950
      %v952 = vpop.f32.mrb[0].mxu0
      %953 = vmatprep.mubr.bf16.mxu0 0
      %954 = vmatmul.mubr.bf16.gmra.mrb[0].mxu0 %v721
      %v955 = vpop.f32.mrb[0].mxu0
      %v956 = vadd.f32 %v392, %v955
      %v957 = vpop.f32.mrb[0].mxu0
      %v958 = vpop.f32.mrb[0].mxu0
      %v959 = vadd.f32 %v392, %v958
      %v960 = vpop.f32.mrb[0].mxu0
      %961 = vmatprep.mubr.bf16.mxu0 0
      %962 = vmatmul.mubr.bf16.gmra.mrb[0].mxu0 %v724
      %v963 = vpop.f32.mrb[0].mxu0
      %v964 = vadd.f32 %v392, %v963
      %v965 = vpop.f32.mrb[0].mxu0
      %v966 = vpop.f32.mrb[0].mxu0
      %v967 = vadd.f32 %v392, %v966
      %v968 = vpop.f32.mrb[0].mxu0
      %969 = vmatprep.mubr.bf16.mxu0 0
      %970 = vmatmul.mubr.bf16.gmra.mrb[0].mxu0 %v727
      %v971 = vpop.f32.mrb[0].mxu0
      %v972 = vadd.f32 %v392, %v971
      %v973 = vpop.f32.mrb[0].mxu0
      %v974 = vpop.f32.mrb[0].mxu0
      %v975 = vadd.f32 %v392, %v974
      %v976 = vpop.f32.mrb[0].mxu0
      %977 = vmatprep.mubr.bf16.mxu0 0
      %978 = vmatmul.mubr.bf16.gmra.mrb[0].mxu0 %v730
      %v979 = vpop.f32.mrb[0].mxu0
      %v980 = vadd.f32 %v392, %v979
      %v981 = vpop.f32.mrb[0].mxu0
      %v982 = vpop.f32.mrb[0].mxu0
      %v983 = vadd.f32 %v392, %v982
      %v984 = vpop.f32.mrb[0].mxu0
      %985 = vmatprep.mubr.bf16.mxu0 0
      %986 = vmatmul.mubr.bf16.gmra.mrb[0].mxu0 %v733
      %v987 = vpop.f32.mrb[0].mxu0
      %v988 = vadd.f32 %v392, %v987
      %v989 = vpop.f32.mrb[0].mxu0
      %v990 = vpop.f32.mrb[0].mxu0
      %v991 = vadd.f32 %v392, %v990
      %v992 = vpop.f32.mrb[0].mxu0
      %993 = vmatprep.mubr.bf16.mxu0 0
      %994 = vmatmul.mubr.bf16.gmra.mrb[0].mxu0 %v736
      %v995 = vpop.f32.mrb[0].mxu0
      %v996 = vadd.f32 %v392, %v995
      %v997 = vpop.f32.mrb[0].mxu0
      %v998 = vpop.f32.mrb[0].mxu0
      %v999 = vadd.f32 %v392, %v998
      %v1000 = vpop.f32.mrb[0].mxu0
      %1001 = vmatprep.mubr.bf16.mxu0 0
      %1002 = vmatmul.mubr.bf16.gmra.mrb[0].mxu0 %v739
      %v1003 = vpop.f32.mrb[0].mxu0
      %v1004 = vadd.f32 %v392, %v1003
      %v1005 = vpop.f32.mrb[0].mxu0
      %v1006 = vpop.f32.mrb[0].mxu0
      %v1007 = vadd.f32 %v392, %v1006
      %v1008 = vpop.f32.mrb[0].mxu0
      %1009 = vmatprep.mubr.bf16.mxu0 0
      %1010 = vmatmul.mubr.bf16.gmra.mrb[0].mxu0 %v742
      %v1011 = vpop.f32.mrb[0].mxu0
      %v1012 = vadd.f32 %v392, %v1011
      %v1013 = vpop.f32.mrb[0].mxu0
      %v1014 = vpop.f32.mrb[0].mxu0
      %v1015 = vadd.f32 %v392, %v1014
      %v1016 = vpop.f32.mrb[0].mxu0
      %1017 = vmatprep.mubr.bf16.mxu0 0
      %1018 = vmatmul.mubr.bf16.gmra.mrb[0].mxu0 %v745
      %v1019 = vpop.f32.mrb[0].mxu0
      %v1020 = vadd.f32 %v392, %v1019
      %v1021 = vpop.f32.mrb[0].mxu0
      %v1022 = vpop.f32.mrb[0].mxu0
      %v1023 = vadd.f32 %v392, %v1022
      %v1024 = vpop.f32.mrb[0].mxu0
      %1025 = vmatprep.mubr.bf16.mxu0 0
      %1026 = vmatmul.mubr.bf16.gmra.mrb[0].mxu0 %v748
      %v1027 = vpop.f32.mrb[0].mxu0
      %v1028 = vadd.f32 %v392, %v1027
      %v1029 = vpop.f32.mrb[0].mxu0
      %v1030 = vpop.f32.mrb[0].mxu0
      %v1031 = vadd.f32 %v392, %v1030
      %v1032 = vpop.f32.mrb[0].mxu0
      %1033 = vmatprep.mubr.bf16.mxu0 0
      %1034 = vmatmul.mubr.bf16.gmra.mrb[0].mxu0 %v751
      %v1035 = vpop.f32.mrb[0].mxu0
      %v1036 = vadd.f32 %v392, %v1035
      %v1037 = vpop.f32.mrb[0].mxu0
      %v1038 = vpop.f32.mrb[0].mxu0
      %v1039 = vadd.f32 %v392, %v1038
      %v1040 = vpop.f32.mrb[0].mxu0
      %1041 = vmatprep.mubr.bf16.mxu0 0
      %1042 = vmatmul.mubr.bf16.gmra.mrb[0].mxu0 %v754
      %v1043 = vpop.f32.mrb[0].mxu0
      %v1044 = vadd.f32 %v392, %v1043
      %v1045 = vpop.f32.mrb[0].mxu0
      %v1046 = vpop.f32.mrb[0].mxu0
      %v1047 = vadd.f32 %v392, %v1046
      %v1048 = vpop.f32.mrb[0].mxu0
      %1049 = vmatprep.mubr.bf16.mxu0 0
      %1050 = vmatmul.mubr.bf16.gmra.mrb[0].mxu0 %v757
      %v1051 = vpop.f32.mrb[0].mxu0
      %v1052 = vadd.f32 %v392, %v1051
      %v1053 = vpop.f32.mrb[0].mxu0
      %v1054 = vpop.f32.mrb[0].mxu0
      %v1055 = vadd.f32 %v392, %v1054
      %v1056 = vpop.f32.mrb[0].mxu0
      %1057 = vmatprep.mubr.bf16.mxu0 0
      %1058 = vmatmul.mubr.bf16.gmra.mrb[0].mxu0 %v760
      %v1059 = vpop.f32.mrb[0].mxu0
      %v1060 = vadd.f32 %v392, %v1059
      %v1061 = vpop.f32.mrb[0].mxu0
      %v1062 = vpop.f32.mrb[0].mxu0
      %v1063 = vadd.f32 %v392, %v1062
      %v1064 = vpop.f32.mrb[0].mxu0
      %1065 = vmatprep.mubr.bf16.mxu0 0
      %1066 = vmatmul.mubr.bf16.gmra.mrb[0].mxu0 %v763
      %v1067 = vpop.f32.mrb[0].mxu0
      %v1068 = vadd.f32 %v392, %v1067
      %v1069 = vpop.f32.mrb[0].mxu0
      %v1070 = vpop.f32.mrb[0].mxu0
      %v1071 = vadd.f32 %v392, %v1070
      %v1072 = vpop.f32.mrb[0].mxu0
      %1073 = vmatprep.mubr.bf16.mxu0 0
      %1074 = vmatmul.mubr.bf16.gmra.mrb[0].mxu0 %v766
      %v1075 = vpop.f32.mrb[0].mxu0
      %v1076 = vadd.f32 %v392, %v1075
      %v1077 = vpop.f32.mrb[0].mxu0
      %v1078 = vpop.f32.mrb[0].mxu0
      %v1079 = vadd.f32 %v392, %v1078
      %v1080 = vpop.f32.mrb[0].mxu0
      %1081 = vmatprep.mubr.bf16.mxu0 0
      %1082 = vmatmul.mubr.bf16.gmra.mrb[0].mxu0 %v769
      %v1083 = vpop.f32.mrb[0].mxu0
      %v1084 = vadd.f32 %v392, %v1083
      %v1085 = vpop.f32.mrb[0].mxu0
      %v1086 = vpop.f32.mrb[0].mxu0
      %v1087 = vadd.f32 %v392, %v1086
      %v1088 = vpop.f32.mrb[0].mxu0
      %1089 = vmatprep.mubr.bf16.mxu0 0
      %1090 = vmatmul.mubr.bf16.gmra.mrb[0].mxu0 %v772
      %v1091 = vpop.f32.mrb[0].mxu0
      %v1092 = vadd.f32 %v392, %v1091
      %v1093 = vpop.f32.mrb[0].mxu0
      %v1094 = vpop.f32.mrb[0].mxu0
      %v1095 = vadd.f32 %v392, %v1094
      %v1096 = vpop.f32.mrb[0].mxu0
      %1097 = vmatprep.mubr.bf16.mxu0 0
      %1098 = vmatmul.mubr.bf16.gmra.mrb[0].mxu0 %v775
      %v1099 = vpop.f32.mrb[0].mxu0
      %v1100 = vadd.f32 %v392, %v1099
      %v1101 = vpop.f32.mrb[0].mxu0
      %v1102 = vpop.f32.mrb[0].mxu0
      %v1103 = vadd.f32 %v392, %v1102
      %v1104 = vpop.f32.mrb[0].mxu0
      %1105 = vmatprep.mubr.bf16.mxu0 0
      %1106 = vmatmul.mubr.bf16.gmra.mrb[0].mxu0 %v778
      %v1107 = vpop.f32.mrb[0].mxu0
      %v1108 = vadd.f32 %v392, %v1107
      %v1109 = vpop.f32.mrb[0].mxu0
      %v1110 = vpop.f32.mrb[0].mxu0
      %v1111 = vadd.f32 %v392, %v1110
      %v1112 = vpop.f32.mrb[0].mxu0
      %1113 = vmatprep.mubr.bf16.mxu0 0
      %1114 = vmatmul.mubr.bf16.gmra.mrb[0].mxu0 %v781
      %v1115 = vpop.f32.mrb[0].mxu0
      %v1116 = vadd.f32 %v392, %v1115
      %v1117 = vpop.f32.mrb[0].mxu0
      %v1118 = vpop.f32.mrb[0].mxu0
      %v1119 = vadd.f32 %v392, %v1118
      %v1120 = vpop.f32.mrb[0].mxu0
      %1121 = vmatprep.mubr.bf16.mxu0 0
      %1122 = vmatmul.mubr.bf16.gmra.mrb[0].mxu0 %v784
      %v1123 = vpop.f32.mrb[0].mxu0
      %v1124 = vadd.f32 %v392, %v1123
      %v1125 = vpop.f32.mrb[0].mxu0
      %v1126 = vpop.f32.mrb[0].mxu0
      %v1127 = vadd.f32 %v392, %v1126
      %v1128 = vpop.f32.mrb[0].mxu0
      %1129 = vmatprep.mubr.bf16.mxu0 0
      %1130 = vmatmul.mubr.bf16.gmra.mrb[0].mxu0 %v787
      %v1131 = vpop.f32.mrb[0].mxu0
      %v1132 = vadd.f32 %v392, %v1131
      %v1133 = vpop.f32.mrb[0].mxu0
      %v1134 = vpop.f32.mrb[0].mxu0
      %v1135 = vadd.f32 %v392, %v1134
      %v1136 = vpop.f32.mrb[0].mxu0
      %1137 = vmatprep.mubr.bf16.mxu0 0
      %1138 = vmatmul.mubr.bf16.gmra.mrb[0].mxu0 %v790
      %v1139 = vpop.f32.mrb[0].mxu0
      %v1140 = vadd.f32 %v392, %v1139
      %v1141 = vpop.f32.mrb[0].mxu0
      %v1142 = vpop.f32.mrb[0].mxu0
      %v1143 = vadd.f32 %v392, %v1142
      %v1144 = vpop.f32.mrb[0].mxu0
      %1145 = vmatprep.mubr.bf16.mxu0 0
      %1146 = vmatmul.mubr.bf16.gmra.mrb[0].mxu0 %v793
      %v1147 = vpop.f32.mrb[0].mxu0
      %v1148 = vadd.f32 %v392, %v1147
      %v1149 = vpop.f32.mrb[0].mxu0
      %v1150 = vpop.f32.mrb[0].mxu0
      %v1151 = vadd.f32 %v392, %v1150
      %v1152 = vpop.f32.mrb[0].mxu0
      %1153 = vmatprep.mubr.bf16.mxu0 0
      %1154 = vmatmul.mubr.bf16.gmra.mrb[0].mxu0 %v796
      %v1155 = vpop.f32.mrb[0].mxu0
      %v1156 = vadd.f32 %v392, %v1155
      %v1157 = vpop.f32.mrb[0].mxu0
      %v1158 = vpop.f32.mrb[0].mxu0
      %v1159 = vadd.f32 %v392, %v1158
      %v1160 = vpop.f32.mrb[0].mxu0
      %1161 = vmatprep.mubr.bf16.mxu0 0
      %1162 = vmatmul.mubr.bf16.gmra.mrb[0].mxu0 %v799
      %v1163 = vpop.f32.mrb[0].mxu0
      %v1164 = vadd.f32 %v392, %v1163
      %v1165 = vpop.f32.mrb[0].mxu0
      %v1166 = vpop.f32.mrb[0].mxu0
      %v1167 = vadd.f32 %v392, %v1166
      %v1168 = vpop.f32.mrb[0].mxu0
      %1169 = vmatprep.mubr.bf16.mxu0 0
      %1170 = vmatmul.mubr.bf16.gmra.mrb[0].mxu0 %v802
      %v1171 = vpop.f32.mrb[0].mxu0
      %v1172 = vadd.f32 %v392, %v1171
      %v1173 = vpop.f32.mrb[0].mxu0
      %v1174 = vpop.f32.mrb[0].mxu0
      %v1175 = vadd.f32 %v392, %v1174
      %v1176 = vpop.f32.mrb[0].mxu0
      %1177 = vmatprep.mubr.bf16.mxu0 0
      %1178 = vmatmul.mubr.bf16.gmra.mrb[0].mxu0 %v805
      %v1179 = vpop.f32.mrb[0].mxu0
      %v1180 = vadd.f32 %v392, %v1179
      %v1181 = vpop.f32.mrb[0].mxu0
      %v1182 = vpop.f32.mrb[0].mxu0
      %v1183 = vadd.f32 %v392, %v1182
      %v1184 = vpop.f32.mrb[0].mxu0
      %1185 = vmatprep.mubr.bf16.mxu0 0
      %1186 = vmatmul.mubr.bf16.gmra.mrb[0].mxu0 %v808
      %v1187 = vpop.f32.mrb[0].mxu0
      %v1188 = vadd.f32 %v392, %v1187
      %v1189 = vpop.f32.mrb[0].mxu0
      %v1190 = vpop.f32.mrb[0].mxu0
      %v1191 = vadd.f32 %v392, %v1190
      %v1192 = vpop.f32.mrb[0].mxu0
      %1193 = vmatprep.mubr.bf16.mxu0 0
      %1194 = vmatmul.mubr.bf16.gmra.mrb[0].mxu0 %v811
      %v1195 = vpop.f32.mrb[0].mxu0
      %v1196 = vadd.f32 %v392, %v1195
      %v1197 = vpop.f32.mrb[0].mxu0
      %v1198 = vpop.f32.mrb[0].mxu0
      %v1199 = vadd.f32 %v392, %v1198
      %v1200 = vpop.f32.mrb[0].mxu0
      %1201 = vmatprep.mubr.bf16.mxu0 0
      %1202 = vmatmul.mubr.bf16.gmra.mrb[0].mxu0 %v814
      %v1203 = vpop.f32.mrb[0].mxu0
      %v1204 = vadd.f32 %v392, %v1203
      %v1205 = vpop.f32.mrb[0].mxu0
      %v1206 = vpop.f32.mrb[0].mxu0
      %v1207 = vadd.f32 %v392, %v1206
      %v1208 = vpop.f32.mrb[0].mxu0
      %1209 = vmatprep.mubr.bf16.mxu0 0
      %1210 = vmatmul.mubr.bf16.gmra.mrb[0].mxu0 %v817
      %v1211 = vpop.f32.mrb[0].mxu0
      %v1212 = vadd.f32 %v392, %v1211
      %v1213 = vpop.f32.mrb[0].mxu0
      %v1214 = vpop.f32.mrb[0].mxu0
      %v1215 = vadd.f32 %v392, %v1214
      %v1216 = vpop.f32.mrb[0].mxu0
      %1217 = vmatprep.mubr.bf16.mxu0 0
      %1218 = vmatmul.mubr.bf16.gmra.mrb[0].mxu0 %v820
      %v1219 = vpop.f32.mrb[0].mxu0
      %v1220 = vadd.f32 %v392, %v1219
      %v1221 = vpop.f32.mrb[0].mxu0
      %v1222 = vpop.f32.mrb[0].mxu0
      %v1223 = vadd.f32 %v392, %v1222
      %v1224 = vpop.f32.mrb[0].mxu0
      %1225 = vmatprep.mubr.bf16.mxu0 0
      %1226 = vmatmul.mubr.bf16.gmra.mrb[0].mxu0 %v823
      %v1227 = vpop.f32.mrb[0].mxu0
      %v1228 = vadd.f32 %v392, %v1227
      %v1229 = vpop.f32.mrb[0].mxu0
      %v1230 = vpop.f32.mrb[0].mxu0
      %v1231 = vadd.f32 %v392, %v1230
      %v1232 = vpop.f32.mrb[0].mxu0
      %1233 = vmatprep.mubr.bf16.mxu0 0
      %1234 = vmatmul.mubr.bf16.gmra.mrb[0].mxu0 %v826
      %v1235 = vpop.f32.mrb[0].mxu0
      %v1236 = vadd.f32 %v392, %v1235
      %v1237 = vpop.f32.mrb[0].mxu0
      %v1238 = vpop.f32.mrb[0].mxu0
      %v1239 = vadd.f32 %v392, %v1238
      %v1240 = vpop.f32.mrb[0].mxu0
      %1241 = vmatprep.mubr.bf16.mxu0 0
      %1242 = vmatmul.mubr.bf16.gmra.mrb[0].mxu0 %v829
      %v1243 = vpop.f32.mrb[0].mxu0
      %v1244 = vadd.f32 %v392, %v1243
      %v1245 = vpop.f32.mrb[0].mxu0
      %v1246 = vpop.f32.mrb[0].mxu0
      %v1247 = vadd.f32 %v392, %v1246
      %v1248 = vpop.f32.mrb[0].mxu0
      %1249 = vmatprep.mubr.bf16.mxu0 0
      %1250 = vmatmul.mubr.bf16.gmra.mrb[0].mxu0 %v832
      %v1251 = vpop.f32.mrb[0].mxu0
      %v1252 = vadd.f32 %v392, %v1251
      %v1253 = vpop.f32.mrb[0].mxu0
      %v1254 = vpop.f32.mrb[0].mxu0
      %v1255 = vadd.f32 %v392, %v1254
      %v1256 = vpop.f32.mrb[0].mxu0
      %1257 = vmatprep.mubr.bf16.mxu0 0
      %1258 = vmatmul.mubr.bf16.gmra.mrb[0].mxu0 %v835
      %v1259 = vpop.f32.mrb[0].mxu0
      %v1260 = vadd.f32 %v392, %v1259
      %v1261 = vpop.f32.mrb[0].mxu0
      %v1262 = vpop.f32.mrb[0].mxu0
      %v1263 = vadd.f32 %v392, %v1262
      %v1264 = vpop.f32.mrb[0].mxu0
      %1265 = vmatprep.mubr.bf16.mxu0 0
      %1266 = vmatmul.mubr.bf16.gmra.mrb[0].mxu0 %v838
      %v1267 = vpop.f32.mrb[0].mxu0
      %v1268 = vadd.f32 %v392, %v1267
      %v1269 = vpop.f32.mrb[0].mxu0
      %v1270 = vpop.f32.mrb[0].mxu0
      %v1271 = vadd.f32 %v392, %v1270
      %v1272 = vpop.f32.mrb[0].mxu0
      %1273 = vmatprep.mubr.bf16.mxu0 0
      %1274 = vmatmul.mubr.bf16.gmra.mrb[0].mxu0 %v841
      %v1275 = vpop.f32.mrb[0].mxu0
      %v1276 = vadd.f32 %v392, %v1275
      %v1277 = vpop.f32.mrb[0].mxu0
      %v1278 = vpop.f32.mrb[0].mxu0
      %v1279 = vadd.f32 %v392, %v1278
      %v1280 = vpop.f32.mrb[0].mxu0
      %1281 = vmatprep.mubr.bf16.mxu0 0
      %1282 = vmatmul.mubr.bf16.gmra.mrb[0].mxu0 %v844
      %v1283 = vpop.f32.mrb[0].mxu0
      %v1284 = vadd.f32 %v392, %v1283
      %v1285 = vpop.f32.mrb[0].mxu0
      %v1286 = vpop.f32.mrb[0].mxu0
      %v1287 = vadd.f32 %v392, %v1286
      %v1288 = vpop.f32.mrb[0].mxu0
      %1289 = vmatprep.mubr.bf16.mxu0 0
      %1290 = vmatmul.mubr.bf16.gmra.mrb[0].mxu0 %v847
      %v1291 = vpop.f32.mrb[0].mxu0
      %v1292 = vadd.f32 %v392, %v1291
      %v1293 = vpop.f32.mrb[0].mxu0
      %v1294 = vpop.f32.mrb[0].mxu0
      %v1295 = vadd.f32 %v392, %v1294
      %v1296 = vpop.f32.mrb[0].mxu0
      %1297 = vmatprep.mubr.bf16.mxu0 0
      %1298 = vmatmul.mubr.bf16.gmra.mrb[0].mxu0 %v850
      %v1299 = vpop.f32.mrb[0].mxu0
      %v1300 = vadd.f32 %v392, %v1299
      %v1301 = vpop.f32.mrb[0].mxu0
      %v1302 = vpop.f32.mrb[0].mxu0
      %v1303 = vadd.f32 %v392, %v1302
      %v1304 = vpop.f32.mrb[0].mxu0
      %1305 = vmatprep.mubr.bf16.mxu0 0
      %1306 = vmatmul.mubr.bf16.gmra.mrb[0].mxu0 %v853
      %v1307 = vpop.f32.mrb[0].mxu0
      %v1308 = vadd.f32 %v392, %v1307
      %v1309 = vpop.f32.mrb[0].mxu0
      %v1310 = vpop.f32.mrb[0].mxu0
      %v1311 = vadd.f32 %v392, %v1310
      %v1312 = vpop.f32.mrb[0].mxu0
      %1313 = vmatprep.mubr.bf16.mxu0 0
      %1314 = vmatmul.mubr.bf16.gmra.mrb[0].mxu0 %v856
      %v1315 = vpop.f32.mrb[0].mxu0
      %v1316 = vadd.f32 %v392, %v1315
      %v1317 = vpop.f32.mrb[0].mxu0
      %v1318 = vpop.f32.mrb[0].mxu0
      %v1319 = vadd.f32 %v392, %v1318
      %v1320 = vpop.f32.mrb[0].mxu0
      %1321 = vmatprep.mubr.bf16.mxu0 0
      %1322 = vmatmul.mubr.bf16.gmra.mrb[0].mxu0 %v859
      %v1323 = vpop.f32.mrb[0].mxu0
      %v1324 = vadd.f32 %v392, %v1323
      %v1325 = vpop.f32.mrb[0].mxu0
      %v1326 = vpop.f32.mrb[0].mxu0
      %v1327 = vadd.f32 %v392, %v1326
      %v1328 = vpop.f32.mrb[0].mxu0
      %1329 = vmatprep.mubr.bf16.mxu0 0
      %1330 = vmatmul.mubr.bf16.gmra.mrb[0].mxu0 %v862
      %v1331 = vpop.f32.mrb[0].mxu0
      %v1332 = vadd.f32 %v392, %v1331
      %v1333 = vpop.f32.mrb[0].mxu0
      %v1334 = vpop.f32.mrb[0].mxu0
      %v1335 = vadd.f32 %v392, %v1334
      %v1336 = vpop.f32.mrb[0].mxu0
      %1337 = vmatprep.mubr.bf16.mxu0 0
      %1338 = vmatmul.mubr.bf16.gmra.mrb[0].mxu0 %v865
      %v1339 = vpop.f32.mrb[0].mxu0
      %v1340 = vadd.f32 %v392, %v1339
      %v1341 = vpop.f32.mrb[0].mxu0
      %v1342 = vpop.f32.mrb[0].mxu0
      %v1343 = vadd.f32 %v392, %v1342
      %v1344 = vpop.f32.mrb[0].mxu0
      %1345 = vmatprep.mubr.bf16.mxu0 0
      %1346 = vmatmul.mubr.bf16.gmra.mrb[0].mxu0 %v868
      %v1347 = vpop.f32.mrb[0].mxu0
      %v1348 = vadd.f32 %v392, %v1347
      %v1349 = vpop.f32.mrb[0].mxu0
      %v1350 = vpop.f32.mrb[0].mxu0
      %v1351 = vadd.f32 %v392, %v1350
      %v1352 = vpop.f32.mrb[0].mxu0
      %1353 = vmatprep.mubr.bf16.mxu0 0
      %1354 = vmatmul.mubr.bf16.gmra.mrb[0].mxu0 %v871
      %v1355 = vpop.f32.mrb[0].mxu0
      %v1356 = vadd.f32 %v392, %v1355
      %v1357 = vpop.f32.mrb[0].mxu0
      %v1358 = vpop.f32.mrb[0].mxu0
      %v1359 = vpop.f32.mrb[0].mxu0
      %1360 = vdwg.mxu0
      %v1361 = vmax.f32 %v908, 0.0
      %v1362 = vmax.f32 %v911, 0.0
      %v1363 = vmax.f32 %v916, 0.0
      %v1364 = vmax.f32 %v919, 0.0
      %v1365 = vmax.f32 %v924, 0.0
      %v1366 = vmax.f32 %v927, 0.0
      %v1367 = vmax.f32 %v932, 0.0
      %v1368 = vmax.f32 %v935, 0.0
      %v1369 = vmax.f32 %v940, 0.0
      %v1370 = vmax.f32 %v943, 0.0
      %v1371 = vmax.f32 %v948, 0.0
      %v1372 = vmax.f32 %v951, 0.0
      %v1373 = vmax.f32 %v956, 0.0
      %v1374 = vmax.f32 %v959, 0.0
      %v1375 = vmax.f32 %v964, 0.0
      %v1376 = vmax.f32 %v967, 0.0
      %v1377 = vmax.f32 %v972, 0.0
      %v1378 = vmax.f32 %v975, 0.0
      %v1379 = vmax.f32 %v980, 0.0
      %v1380 = vmax.f32 %v983, 0.0
      %v1381 = vmax.f32 %v988, 0.0
      %v1382 = vmax.f32 %v991, 0.0
      %v1383 = vmax.f32 %v996, 0.0
      %v1384 = vmax.f32 %v999, 0.0
      %v1385 = vmax.f32 %v1004, 0.0
      %v1386 = vmax.f32 %v1007, 0.0
      %v1387 = vmax.f32 %v1012, 0.0
      %v1388 = vmax.f32 %v1015, 0.0
      %v1389 = vmax.f32 %v1020, 0.0
      %v1390 = vmax.f32 %v1023, 0.0
      %v1391 = vmax.f32 %v1028, 0.0
      %v1392 = vmax.f32 %v1031, 0.0
      %v1393 = vmax.f32 %v1036, 0.0
      %v1394 = vmax.f32 %v1039, 0.0
      %v1395 = vmax.f32 %v1044, 0.0
      %v1396 = vmax.f32 %v1047, 0.0
      %v1397 = vmax.f32 %v1052, 0.0
      %v1398 = vmax.f32 %v1055, 0.0
      %v1399 = vmax.f32 %v1060, 0.0
      %v1400 = vmax.f32 %v1063, 0.0
      %v1401 = vmax.f32 %v1068, 0.0
      %v1402 = vmax.f32 %v1071, 0.0
      %v1403 = vmax.f32 %v1076, 0.0
      %v1404 = vmax.f32 %v1079, 0.0
      %v1405 = vmax.f32 %v1084, 0.0
      %v1406 = vmax.f32 %v1087, 0.0
      %v1407 = vmax.f32 %v1092, 0.0
      %v1408 = vmax.f32 %v1095, 0.0
      %v1409 = vmax.f32 %v1100, 0.0
      %v1410 = vmax.f32 %v1103, 0.0
      %v1411 = vmax.f32 %v1108, 0.0
      %v1412 = vmax.f32 %v1111, 0.0
      %v1413 = vmax.f32 %v1116, 0.0
      %v1414 = vmax.f32 %v1119, 0.0
      %v1415 = vmax.f32 %v1124, 0.0
      %v1416 = vmax.f32 %v1127, 0.0
      %v1417 = vmax.f32 %v1132, 0.0
      %v1418 = vmax.f32 %v1135, 0.0
      %v1419 = vmax.f32 %v1140, 0.0
      %v1420 = vmax.f32 %v1143, 0.0
      %v1421 = vmax.f32 %v1148, 0.0
      %v1422 = vmax.f32 %v1151, 0.0
      %v1423 = vmax.f32 %v1156, 0.0
      %v1424 = vmax.f32 %v1159, 0.0
      %v1425 = vmax.f32 %v1164, 0.0
      %v1426 = vmax.f32 %v1167, 0.0
      %v1427 = vmax.f32 %v1172, 0.0
      %v1428 = vmax.f32 %v1175, 0.0
      %v1429 = vmax.f32 %v1180, 0.0
      %v1430 = vmax.f32 %v1183, 0.0
      %v1431 = vmax.f32 %v1188, 0.0
      %v1432 = vmax.f32 %v1191, 0.0
      %v1433 = vmax.f32 %v1196, 0.0
      %v1434 = vmax.f32 %v1199, 0.0
      %v1435 = vmax.f32 %v1204, 0.0
      %v1436 = vmax.f32 %v1207, 0.0
      %v1437 = vmax.f32 %v1212, 0.0
      %v1438 = vmax.f32 %v1215, 0.0
      %v1439 = vmax.f32 %v1220, 0.0
      %v1440 = vmax.f32 %v1223, 0.0
      %v1441 = vmax.f32 %v1228, 0.0
      %v1442 = vmax.f32 %v1231, 0.0
      %v1443 = vmax.f32 %v1236, 0.0
      %v1444 = vmax.f32 %v1239, 0.0
      %v1445 = vmax.f32 %v1244, 0.0
      %v1446 = vmax.f32 %v1247, 0.0
      %v1447 = vmax.f32 %v1252, 0.0
      %v1448 = vmax.f32 %v1255, 0.0
      %v1449 = vmax.f32 %v1260, 0.0
      %v1450 = vmax.f32 %v1263, 0.0
      %v1451 = vmax.f32 %v1268, 0.0
      %v1452 = vmax.f32 %v1271, 0.0
      %v1453 = vmax.f32 %v1276, 0.0
      %v1454 = vmax.f32 %v1279, 0.0
      %v1455 = vmax.f32 %v1284, 0.0
      %v1456 = vmax.f32 %v1287, 0.0
      %v1457 = vmax.f32 %v1292, 0.0
      %v1458 = vmax.f32 %v1295, 0.0
      %v1459 = vmax.f32 %v1300, 0.0
      %v1460 = vmax.f32 %v1303, 0.0
      %v1461 = vmax.f32 %v1308, 0.0
      %v1462 = vmax.f32 %v1311, 0.0
      %v1463 = vmax.f32 %v1316, 0.0
      %v1464 = vmax.f32 %v1319, 0.0
      %v1465 = vmax.f32 %v1324, 0.0
      %v1466 = vmax.f32 %v1327, 0.0
      %v1467 = vmax.f32 %v1332, 0.0
      %v1468 = vmax.f32 %v1335, 0.0
      %v1469 = vmax.f32 %v1340, 0.0
      %v1470 = vmax.f32 %v1343, 0.0
      %v1471 = vmax.f32 %v1348, 0.0
      %v1472 = vmax.f32 %v1351, 0.0
      %v1473 = vmax.f32 %v1356, 0.0
      %vm1474 = vcmask 130048
      %1475 = vst.msk [vmem:[%s259] sm:$0xff] %vm1474, %v1361
      %1476 = vst.msk [vmem:[%s259 + $0x8] sm:$0xff] %vm1474, %v1362
      %1477 = vst.msk [vmem:[%s259 + $0x10] sm:$0xff] %vm1474, %v1363
      %1478 = vst.msk [vmem:[%s259 + $0x18] sm:$0xff] %vm1474, %v1364
      %1479 = vst.msk [vmem:[%s259 + $0x20] sm:$0xff] %vm1474, %v1365
      %1480 = vst.msk [vmem:[%s259 + $0x28] sm:$0xff] %vm1474, %v1366
      %1481 = vst.msk [vmem:[%s259 + $0x30] sm:$0xff] %vm1474, %v1367
      %1482 = vst.msk [vmem:[%s259 + $0x38] sm:$0xff] %vm1474, %v1368
      %1483 = vst.msk [vmem:[%s259 + $0x40] sm:$0xff] %vm1474, %v1369
      %1484 = vst.msk [vmem:[%s259 + $0x48] sm:$0xff] %vm1474, %v1370
      %1485 = vst.msk [vmem:[%s259 + $0x50] sm:$0xff] %vm1474, %v1371
      %1486 = vst.msk [vmem:[%s259 + $0x58] sm:$0xff] %vm1474, %v1372
      %1487 = vst.msk [vmem:[%s259 + $0x60] sm:$0xff] %vm1474, %v1373
      %1488 = vst.msk [vmem:[%s259 + $0x68] sm:$0xff] %vm1474, %v1374
      %1489 = vst.msk [vmem:[%s259 + $0x70] sm:$0xff] %vm1474, %v1375
      %1490 = vst.msk [vmem:[%s259 + $0x78] sm:$0xff] %vm1474, %v1376
      %1491 = vst.msk [vmem:[%s259 + $0x80] sm:$0xff] %vm1474, %v1377
      %1492 = vst.msk [vmem:[%s259 + $0x88] sm:$0xff] %vm1474, %v1378
      %1493 = vst.msk [vmem:[%s259 + $0x90] sm:$0xff] %vm1474, %v1379
      %1494 = vst.msk [vmem:[%s259 + $0x98] sm:$0xff] %vm1474, %v1380
      %1495 = vst.msk [vmem:[%s259 + $0xa0] sm:$0xff] %vm1474, %v1381
      %1496 = vst.msk [vmem:[%s259 + $0xa8] sm:$0xff] %vm1474, %v1382
      %1497 = vst.msk [vmem:[%s259 + $0xb0] sm:$0xff] %vm1474, %v1383
      %1498 = vst.msk [vmem:[%s259 + $0xb8] sm:$0xff] %vm1474, %v1384
      %1499 = vst.msk [vmem:[%s259 + $0xc0] sm:$0xff] %vm1474, %v1385
      %1500 = vst.msk [vmem:[%s259 + $0xc8] sm:$0xff] %vm1474, %v1386
      %1501 = vst.msk [vmem:[%s259 + $0xd0] sm:$0xff] %vm1474, %v1387
      %1502 = vst.msk [vmem:[%s259 + $0xd8] sm:$0xff] %vm1474, %v1388
      %1503 = vst.msk [vmem:[%s259 + $0xe0] sm:$0xff] %vm1474, %v1389
      %1504 = vst.msk [vmem:[%s259 + $0xe8] sm:$0xff] %vm1474, %v1390
      %1505 = vst.msk [vmem:[%s259 + $0xf0] sm:$0xff] %vm1474, %v1391
      %1506 = vst.msk [vmem:[%s259 + $0xf8] sm:$0xff] %vm1474, %v1392
      %1507 = vst.msk [vmem:[%s259 + $0x100] sm:$0xff] %vm1474, %v1393
      %1508 = vst.msk [vmem:[%s259 + $0x108] sm:$0xff] %vm1474, %v1394
      %1509 = vst.msk [vmem:[%s259 + $0x110] sm:$0xff] %vm1474, %v1395
      %1510 = vst.msk [vmem:[%s259 + $0x118] sm:$0xff] %vm1474, %v1396
      %1511 = vst.msk [vmem:[%s259 + $0x120] sm:$0xff] %vm1474, %v1397
      %1512 = vst.msk [vmem:[%s259 + $0x128] sm:$0xff] %vm1474, %v1398
      %1513 = vst.msk [vmem:[%s259 + $0x130] sm:$0xff] %vm1474, %v1399
      %1514 = vst.msk [vmem:[%s259 + $0x138] sm:$0xff] %vm1474, %v1400
      %1515 = vst.msk [vmem:[%s259 + $0x140] sm:$0xff] %vm1474, %v1401
      %1516 = vst.msk [vmem:[%s259 + $0x148] sm:$0xff] %vm1474, %v1402
      %1517 = vst.msk [vmem:[%s259 + $0x150] sm:$0xff] %vm1474, %v1403
      %1518 = vst.msk [vmem:[%s259 + $0x158] sm:$0xff] %vm1474, %v1404
      %1519 = vst.msk [vmem:[%s259 + $0x160] sm:$0xff] %vm1474, %v1405
      %1520 = vst.msk [vmem:[%s259 + $0x168] sm:$0xff] %vm1474, %v1406
      %1521 = vst.msk [vmem:[%s259 + $0x170] sm:$0xff] %vm1474, %v1407
      %1522 = vst.msk [vmem:[%s259 + $0x178] sm:$0xff] %vm1474, %v1408
      %1523 = vst.msk [vmem:[%s259 + $0x180] sm:$0xff] %vm1474, %v1409
      %1524 = vst.msk [vmem:[%s259 + $0x188] sm:$0xff] %vm1474, %v1410
      %1525 = vst.msk [vmem:[%s259 + $0x190] sm:$0xff] %vm1474, %v1411
      %1526 = vst.msk [vmem:[%s259 + $0x198] sm:$0xff] %vm1474, %v1412
      %1527 = vst.msk [vmem:[%s259 + $0x1a0] sm:$0xff] %vm1474, %v1413
      %1528 = vst.msk [vmem:[%s259 + $0x1a8] sm:$0xff] %vm1474, %v1414
      %1529 = vst.msk [vmem:[%s259 + $0x1b0] sm:$0xff] %vm1474, %v1415
      %1530 = vst.msk [vmem:[%s259 + $0x1b8] sm:$0xff] %vm1474, %v1416
      %1531 = vst.msk [vmem:[%s259 + $0x1c0] sm:$0xff] %vm1474, %v1417
      %1532 = vst.msk [vmem:[%s259 + $0x1c8] sm:$0xff] %vm1474, %v1418
      %1533 = vst.msk [vmem:[%s259 + $0x1d0] sm:$0xff] %vm1474, %v1419
      %1534 = vst.msk [vmem:[%s259 + $0x1d8] sm:$0xff] %vm1474, %v1420
      %1535 = vst.msk [vmem:[%s259 + $0x1e0] sm:$0xff] %vm1474, %v1421
      %1536 = vst.msk [vmem:[%s259 + $0x1e8] sm:$0xff] %vm1474, %v1422
      %1537 = vst.msk [vmem:[%s259 + $0x1f0] sm:$0xff] %vm1474, %v1423
      %1538 = vst.msk [vmem:[%s259 + $0x1f8] sm:$0xff] %vm1474, %v1424
      %1539 = vst.msk [vmem:[%s259 + $0x200] sm:$0xff] %vm1474, %v1425
      %1540 = vst.msk [vmem:[%s259 + $0x208] sm:$0xff] %vm1474, %v1426
      %1541 = vst.msk [vmem:[%s259 + $0x210] sm:$0xff] %vm1474, %v1427
      %1542 = vst.msk [vmem:[%s259 + $0x218] sm:$0xff] %vm1474, %v1428
      %1543 = vst.msk [vmem:[%s259 + $0x220] sm:$0xff] %vm1474, %v1429
      %1544 = vst.msk [vmem:[%s259 + $0x228] sm:$0xff] %vm1474, %v1430
      %1545 = vst.msk [vmem:[%s259 + $0x230] sm:$0xff] %vm1474, %v1431
      %1546 = vst.msk [vmem:[%s259 + $0x238] sm:$0xff] %vm1474, %v1432
      %1547 = vst.msk [vmem:[%s259 + $0x240] sm:$0xff] %vm1474, %v1433
      %1548 = vst.msk [vmem:[%s259 + $0x248] sm:$0xff] %vm1474, %v1434
      %1549 = vst.msk [vmem:[%s259 + $0x250] sm:$0xff] %vm1474, %v1435
      %1550 = vst.msk [vmem:[%s259 + $0x258] sm:$0xff] %vm1474, %v1436
      %1551 = vst.msk [vmem:[%s259 + $0x260] sm:$0xff] %vm1474, %v1437
      %1552 = vst.msk [vmem:[%s259 + $0x268] sm:$0xff] %vm1474, %v1438
      %1553 = vst.msk [vmem:[%s259 + $0x270] sm:$0xff] %vm1474, %v1439
      %1554 = vst.msk [vmem:[%s259 + $0x278] sm:$0xff] %vm1474, %v1440
      %1555 = vst.msk [vmem:[%s259 + $0x280] sm:$0xff] %vm1474, %v1441
      %1556 = vst.msk [vmem:[%s259 + $0x288] sm:$0xff] %vm1474, %v1442
      %1557 = vst.msk [vmem:[%s259 + $0x290] sm:$0xff] %vm1474, %v1443
      %1558 = vst.msk [vmem:[%s259 + $0x298] sm:$0xff] %vm1474, %v1444
      %1559 = vst.msk [vmem:[%s259 + $0x2a0] sm:$0xff] %vm1474, %v1445
      %1560 = vst.msk [vmem:[%s259 + $0x2a8] sm:$0xff] %vm1474, %v1446
      %1561 = vst.msk [vmem:[%s259 + $0x2b0] sm:$0xff] %vm1474, %v1447
      %1562 = vst.msk [vmem:[%s259 + $0x2b8] sm:$0xff] %vm1474, %v1448
      %1563 = vst.msk [vmem:[%s259 + $0x2c0] sm:$0xff] %vm1474, %v1449
      %1564 = vst.msk [vmem:[%s259 + $0x2c8] sm:$0xff] %vm1474, %v1450
      %1565 = vst.msk [vmem:[%s259 + $0x2d0] sm:$0xff] %vm1474, %v1451
      %1566 = vst.msk [vmem:[%s259 + $0x2d8] sm:$0xff] %vm1474, %v1452
      %1567 = vst.msk [vmem:[%s259 + $0x2e0] sm:$0xff] %vm1474, %v1453
      %1568 = vst.msk [vmem:[%s259 + $0x2e8] sm:$0xff] %vm1474, %v1454
      %1569 = vst.msk [vmem:[%s259 + $0x2f0] sm:$0xff] %vm1474, %v1455
      %1570 = vst.msk [vmem:[%s259 + $0x2f8] sm:$0xff] %vm1474, %v1456
      %1571 = vst.msk [vmem:[%s259 + $0x300] sm:$0xff] %vm1474, %v1457
      %1572 = vst.msk [vmem:[%s259 + $0x308] sm:$0xff] %vm1474, %v1458
      %1573 = vst.msk [vmem:[%s259 + $0x310] sm:$0xff] %vm1474, %v1459
      %1574 = vst.msk [vmem:[%s259 + $0x318] sm:$0xff] %vm1474, %v1460
      %1575 = vst.msk [vmem:[%s259 + $0x320] sm:$0xff] %vm1474, %v1461
      %1576 = vst.msk [vmem:[%s259 + $0x328] sm:$0xff] %vm1474, %v1462
      %1577 = vst.msk [vmem:[%s259 + $0x330] sm:$0xff] %vm1474, %v1463
      %1578 = vst.msk [vmem:[%s259 + $0x338] sm:$0xff] %vm1474, %v1464
      %1579 = vst.msk [vmem:[%s259 + $0x340] sm:$0xff] %vm1474, %v1465
      %1580 = vst.msk [vmem:[%s259 + $0x348] sm:$0xff] %vm1474, %v1466
      %1581 = vst.msk [vmem:[%s259 + $0x350] sm:$0xff] %vm1474, %v1467
      %1582 = vst.msk [vmem:[%s259 + $0x358] sm:$0xff] %vm1474, %v1468
      %1583 = vst.msk [vmem:[%s259 + $0x360] sm:$0xff] %vm1474, %v1469
      %1584 = vst.msk [vmem:[%s259 + $0x368] sm:$0xff] %vm1474, %v1470
      %1585 = vst.msk [vmem:[%s259 + $0x370] sm:$0xff] %vm1474, %v1471
      %1586 = vst.msk [vmem:[%s259 + $0x378] sm:$0xff] %vm1474, %v1472
      %vm1587 = vcmask 125952
      %1588 = vst.msk [vmem:[%s259 + $0x380] sm:$0xf] %vm1587, %v1473
      %v1589 = vpack.c.bf16 %v1362, %v1361
      %v1590 = vpack.c.bf16 %v1364, %v1363
      %v1591 = vpack.c.bf16 %v1366, %v1365
      %v1592 = vpack.c.bf16 %v1368, %v1367
      %v1593 = vpack.c.bf16 %v1370, %v1369
      %v1594 = vpack.c.bf16 %v1372, %v1371
      %v1595 = vpack.c.bf16 %v1374, %v1373
      %v1596 = vpack.c.bf16 %v1376, %v1375
      %v1597 = vpack.c.bf16 %v1378, %v1377
      %v1598 = vpack.c.bf16 %v1380, %v1379
      %v1599 = vpack.c.bf16 %v1382, %v1381
      %v1600 = vpack.c.bf16 %v1384, %v1383
      %v1601 = vpack.c.bf16 %v1386, %v1385
      %v1602 = vpack.c.bf16 %v1388, %v1387
      %v1603 = vpack.c.bf16 %v1390, %v1389
      %v1604 = vpack.c.bf16 %v1392, %v1391
      %v1605 = vpack.c.bf16 %v1394, %v1393
      %v1606 = vpack.c.bf16 %v1396, %v1395
      %v1607 = vpack.c.bf16 %v1398, %v1397
      %v1608 = vpack.c.bf16 %v1400, %v1399
      %v1609 = vpack.c.bf16 %v1402, %v1401
      %v1610 = vpack.c.bf16 %v1404, %v1403
      %v1611 = vpack.c.bf16 %v1406, %v1405
      %v1612 = vpack.c.bf16 %v1408, %v1407
      %v1613 = vpack.c.bf16 %v1410, %v1409
      %v1614 = vpack.c.bf16 %v1412, %v1411
      %v1615 = vpack.c.bf16 %v1414, %v1413
      %v1616 = vpack.c.bf16 %v1416, %v1415
      %v1617 = vpack.c.bf16 %v1418, %v1417
      %v1618 = vpack.c.bf16 %v1420, %v1419
      %v1619 = vpack.c.bf16 %v1422, %v1421
      %v1620 = vpack.c.bf16 %v1424, %v1423
      %v1621 = vpack.c.bf16 %v1426, %v1425
      %v1622 = vpack.c.bf16 %v1428, %v1427
      %v1623 = vpack.c.bf16 %v1430, %v1429
      %v1624 = vpack.c.bf16 %v1432, %v1431
      %v1625 = vpack.c.bf16 %v1434, %v1433
      %v1626 = vpack.c.bf16 %v1436, %v1435
      %v1627 = vpack.c.bf16 %v1438, %v1437
      %v1628 = vpack.c.bf16 %v1440, %v1439
      %v1629 = vpack.c.bf16 %v1442, %v1441
      %v1630 = vpack.c.bf16 %v1444, %v1443
      %v1631 = vpack.c.bf16 %v1446, %v1445
      %v1632 = vpack.c.bf16 %v1448, %v1447
      %v1633 = vpack.c.bf16 %v1450, %v1449
      %v1634 = vpack.c.bf16 %v1452, %v1451
      %v1635 = vpack.c.bf16 %v1454, %v1453
      %v1636 = vpack.c.bf16 %v1456, %v1455
      %v1637 = vpack.c.bf16 %v1458, %v1457
      %v1638 = vpack.c.bf16 %v1460, %v1459
      %v1639 = vpack.c.bf16 %v1462, %v1461
      %v1640 = vpack.c.bf16 %v1464, %v1463
      %v1641 = vpack.c.bf16 %v1466, %v1465
      %v1642 = vpack.c.bf16 %v1468, %v1467
      %v1643 = vpack.c.bf16 %v1470, %v1469
      %v1644 = vpack.c.bf16 %v1472, %v1471
      %v1645 = vpack.c.bf16 %v1473, %v1473
      %v1646 = vld [vmem:[%s3] sm:$0xf]
      %v1647 = vld [vmem:[%s3 + $0x4] sm:$0xf]
      %v1648 = vld [vmem:[%s4] sm:$0x1]
      %v1650 = vlaneseq
      %v1651 = vshrl.u32 %v1650, 7
      %v1652 = vsub.s32 0, %v1651
      %v1653 = vrot.slane %v1648, %v1652
      %v1657 = vunpack.c.l.b16 %v1646
      %v1658 = vunpack.c.l.b16 %v1647
      %v1659 = vpack.c.b16 %v1658, %v1657
      %v1662 = vsel %vm1474, %v1589, 0
      %v1665 = vsel %vm1474, %v1590, 0
      %v1668 = vsel %vm1474, %v1591, 0
      %v1671 = vsel %vm1474, %v1592, 0
      %v1674 = vsel %vm1474, %v1593, 0
      %v1677 = vsel %vm1474, %v1594, 0
      %v1680 = vsel %vm1474, %v1595, 0
      %v1683 = vsel %vm1474, %v1596, 0
      %v1686 = vsel %vm1474, %v1597, 0
      %v1689 = vsel %vm1474, %v1598, 0
      %v1692 = vsel %vm1474, %v1599, 0
      %v1695 = vsel %vm1474, %v1600, 0
      %v1698 = vsel %vm1474, %v1601, 0
      %v1701 = vsel %vm1474, %v1602, 0
      %v1704 = vsel %vm1474, %v1603, 0
      %v1707 = vsel %vm1474, %v1604, 0
      %v1710 = vsel %vm1474, %v1605, 0
      %v1713 = vsel %vm1474, %v1606, 0
      %v1716 = vsel %vm1474, %v1607, 0
      %v1719 = vsel %vm1474, %v1608, 0
      %v1722 = vsel %vm1474, %v1609, 0
      %v1725 = vsel %vm1474, %v1610, 0
      %v1728 = vsel %vm1474, %v1611, 0
      %v1731 = vsel %vm1474, %v1612, 0
      %v1734 = vsel %vm1474, %v1613, 0
      %v1737 = vsel %vm1474, %v1614, 0
      %v1740 = vsel %vm1474, %v1615, 0
      %v1743 = vsel %vm1474, %v1616, 0
      %v1746 = vsel %vm1474, %v1617, 0
      %v1749 = vsel %vm1474, %v1618, 0
      %v1752 = vsel %vm1474, %v1619, 0
      %v1755 = vsel %vm1474, %v1620, 0
      %v1758 = vsel %vm1474, %v1621, 0
      %v1761 = vsel %vm1474, %v1622, 0
      %v1764 = vsel %vm1474, %v1623, 0
      %v1767 = vsel %vm1474, %v1624, 0
      %v1770 = vsel %vm1474, %v1625, 0
      %v1773 = vsel %vm1474, %v1626, 0
      %v1776 = vsel %vm1474, %v1627, 0
      %v1779 = vsel %vm1474, %v1628, 0
      %v1782 = vsel %vm1474, %v1629, 0
      %v1785 = vsel %vm1474, %v1630, 0
      %v1788 = vsel %vm1474, %v1631, 0
      %v1791 = vsel %vm1474, %v1632, 0
      %v1794 = vsel %vm1474, %v1633, 0
      %v1797 = vsel %vm1474, %v1634, 0
      %v1800 = vsel %vm1474, %v1635, 0
      %v1803 = vsel %vm1474, %v1636, 0
      %v1806 = vsel %vm1474, %v1637, 0
      %v1809 = vsel %vm1474, %v1638, 0
      %v1812 = vsel %vm1474, %v1639, 0
      %v1815 = vsel %vm1474, %v1640, 0
      %v1818 = vsel %vm1474, %v1641, 0
      %v1821 = vsel %vm1474, %v1642, 0
      %v1824 = vsel %vm1474, %v1643, 0
      %v1827 = vsel %vm1474, %v1644, 0
      %v1830 = vsel %vm1474, %v1645, 0
      %1832 = vmatprep.subr.bf16.mxu0 0
      %1833 = vmatpush1.bf16.msra.mxu0 %v1659
      %1834 = vmatprep.subr.bf16.mxu0 0
      %1835 = vmatpush1.bf16.msra.mxu0 0
      %1836 = vmatprep.subr.bf16.mxu0 0
      %1837 = vmatpush1.bf16.msra.mxu0 0
      %1838 = vmatprep.subr.bf16.mxu0 0
      %1839 = vmatpush1.bf16.msra.mxu0 0
      %1840 = vmatprep.subr.bf16.mxu0 0
      %1841 = vmatpush1.bf16.msra.mxu0 0
      %1842 = vmatprep.subr.bf16.mxu0 0
      %1843 = vmatpush1.bf16.msra.mxu0 0
      %1844 = vmatprep.subr.bf16.mxu0 0
      %1845 = vmatpush1.bf16.msra.mxu0 0
      %1846 = vmatprep.subr.bf16.mxu0 0
      %1847 = vmatpush1.bf16.msra.mxu0 0
      %1848 = vmatprep.subr.bf16.mxu0 0
      %1849 = vmatpush1.bf16.msra.mxu0 0
      %1850 = vmatprep.subr.bf16.mxu0 0
      %1851 = vmatpush1.bf16.msra.mxu0 0
      %1852 = vmatprep.subr.bf16.mxu0 0
      %1853 = vmatpush1.bf16.msra.mxu0 0
      %1854 = vmatprep.subr.bf16.mxu0 0
      %1855 = vmatpush1.bf16.msra.mxu0 0
      %1856 = vmatprep.subr.bf16.mxu0 0
      %1857 = vmatpush1.bf16.msra.mxu0 0
      %1858 = vmatprep.subr.bf16.mxu0 0
      %1859 = vmatpush1.bf16.msra.mxu0 0
      %1860 = vmatprep.subr.bf16.mxu0 0
      %1861 = vmatpush1.bf16.msra.mxu0 0
      %1862 = vmatprep.subr.bf16.mxu0 0
      %1863 = vmatpush1.bf16.msra.mxu0 0
      %1864 = vmatprep.mubr.bf16.mxu0 0
      %1865 = vmatmul.mubr.bf16.gmra.mrb[0].mxu0 %v1662
      %v1866 = vpop.f32.mrb[0].mxu0
      %v1867 = vadd.f32 %v1653, %v1866
      %v1868 = vpop.f32.mrb[0].mxu0
      %v1869 = vpop.f32.mrb[0].mxu0
      %v1870 = vadd.f32 %v1653, %v1869
      %v1871 = vpop.f32.mrb[0].mxu0
      %1872 = vmatprep.mubr.bf16.mxu0 0
      %1873 = vmatmul.mubr.bf16.gmra.mrb[0].mxu0 %v1665
      %v1874 = vpop.f32.mrb[0].mxu0
      %v1875 = vadd.f32 %v1653, %v1874
      %v1876 = vpop.f32.mrb[0].mxu0
      %v1877 = vpop.f32.mrb[0].mxu0
      %v1878 = vadd.f32 %v1653, %v1877
      %v1879 = vpop.f32.mrb[0].mxu0
      %1880 = vmatprep.mubr.bf16.mxu0 0
      %1881 = vmatmul.mubr.bf16.gmra.mrb[0].mxu0 %v1668
      %v1882 = vpop.f32.mrb[0].mxu0
      %v1883 = vadd.f32 %v1653, %v1882
      %v1884 = vpop.f32.mrb[0].mxu0
      %v1885 = vpop.f32.mrb[0].mxu0
      %v1886 = vadd.f32 %v1653, %v1885
      %v1887 = vpop.f32.mrb[0].mxu0
      %1888 = vmatprep.mubr.bf16.mxu0 0
      %1889 = vmatmul.mubr.bf16.gmra.mrb[0].mxu0 %v1671
      %v1890 = vpop.f32.mrb[0].mxu0
      %v1891 = vadd.f32 %v1653, %v1890
      %v1892 = vpop.f32.mrb[0].mxu0
      %v1893 = vpop.f32.mrb[0].mxu0
      %v1894 = vadd.f32 %v1653, %v1893
      %v1895 = vpop.f32.mrb[0].mxu0
      %1896 = vmatprep.mubr.bf16.mxu0 0
      %1897 = vmatmul.mubr.bf16.gmra.mrb[0].mxu0 %v1674
      %v1898 = vpop.f32.mrb[0].mxu0
      %v1899 = vadd.f32 %v1653, %v1898
      %v1900 = vpop.f32.mrb[0].mxu0
      %v1901 = vpop.f32.mrb[0].mxu0
      %v1902 = vadd.f32 %v1653, %v1901
      %v1903 = vpop.f32.mrb[0].mxu0
      %1904 = vmatprep.mubr.bf16.mxu0 0
      %1905 = vmatmul.mubr.bf16.gmra.mrb[0].mxu0 %v1677
      %v1906 = vpop.f32.mrb[0].mxu0
      %v1907 = vadd.f32 %v1653, %v1906
      %v1908 = vpop.f32.mrb[0].mxu0
      %v1909 = vpop.f32.mrb[0].mxu0
      %v1910 = vadd.f32 %v1653, %v1909
      %v1911 = vpop.f32.mrb[0].mxu0
      %1912 = vmatprep.mubr.bf16.mxu0 0
      %1913 = vmatmul.mubr.bf16.gmra.mrb[0].mxu0 %v1680
      %v1914 = vpop.f32.mrb[0].mxu0
      %v1915 = vadd.f32 %v1653, %v1914
      %v1916 = vpop.f32.mrb[0].mxu0
      %v1917 = vpop.f32.mrb[0].mxu0
      %v1918 = vadd.f32 %v1653, %v1917
      %v1919 = vpop.f32.mrb[0].mxu0
      %1920 = vmatprep.mubr.bf16.mxu0 0
      %1921 = vmatmul.mubr.bf16.gmra.mrb[0].mxu0 %v1683
      %v1922 = vpop.f32.mrb[0].mxu0
      %v1923 = vadd.f32 %v1653, %v1922
      %v1924 = vpop.f32.mrb[0].mxu0
      %v1925 = vpop.f32.mrb[0].mxu0
      %v1926 = vadd.f32 %v1653, %v1925
      %v1927 = vpop.f32.mrb[0].mxu0
      %1928 = vmatprep.mubr.bf16.mxu0 0
      %1929 = vmatmul.mubr.bf16.gmra.mrb[0].mxu0 %v1686
      %v1930 = vpop.f32.mrb[0].mxu0
      %v1931 = vadd.f32 %v1653, %v1930
      %v1932 = vpop.f32.mrb[0].mxu0
      %v1933 = vpop.f32.mrb[0].mxu0
      %v1934 = vadd.f32 %v1653, %v1933
      %v1935 = vpop.f32.mrb[0].mxu0
      %1936 = vmatprep.mubr.bf16.mxu0 0
      %1937 = vmatmul.mubr.bf16.gmra.mrb[0].mxu0 %v1689
      %v1938 = vpop.f32.mrb[0].mxu0
      %v1939 = vadd.f32 %v1653, %v1938
      %v1940 = vpop.f32.mrb[0].mxu0
      %v1941 = vpop.f32.mrb[0].mxu0
      %v1942 = vadd.f32 %v1653, %v1941
      %v1943 = vpop.f32.mrb[0].mxu0
      %1944 = vmatprep.mubr.bf16.mxu0 0
      %1945 = vmatmul.mubr.bf16.gmra.mrb[0].mxu0 %v1692
      %v1946 = vpop.f32.mrb[0].mxu0
      %v1947 = vadd.f32 %v1653, %v1946
      %v1948 = vpop.f32.mrb[0].mxu0
      %v1949 = vpop.f32.mrb[0].mxu0
      %v1950 = vadd.f32 %v1653, %v1949
      %v1951 = vpop.f32.mrb[0].mxu0
      %1952 = vmatprep.mubr.bf16.mxu0 0
      %1953 = vmatmul.mubr.bf16.gmra.mrb[0].mxu0 %v1695
      %v1954 = vpop.f32.mrb[0].mxu0
      %v1955 = vadd.f32 %v1653, %v1954
      %v1956 = vpop.f32.mrb[0].mxu0
      %v1957 = vpop.f32.mrb[0].mxu0
      %v1958 = vadd.f32 %v1653, %v1957
      %v1959 = vpop.f32.mrb[0].mxu0
      %1960 = vmatprep.mubr.bf16.mxu0 0
      %1961 = vmatmul.mubr.bf16.gmra.mrb[0].mxu0 %v1698
      %v1962 = vpop.f32.mrb[0].mxu0
      %v1963 = vadd.f32 %v1653, %v1962
      %v1964 = vpop.f32.mrb[0].mxu0
      %v1965 = vpop.f32.mrb[0].mxu0
      %v1966 = vadd.f32 %v1653, %v1965
      %v1967 = vpop.f32.mrb[0].mxu0
      %1968 = vmatprep.mubr.bf16.mxu0 0
      %1969 = vmatmul.mubr.bf16.gmra.mrb[0].mxu0 %v1701
      %v1970 = vpop.f32.mrb[0].mxu0
      %v1971 = vadd.f32 %v1653, %v1970
      %v1972 = vpop.f32.mrb[0].mxu0
      %v1973 = vpop.f32.mrb[0].mxu0
      %v1974 = vadd.f32 %v1653, %v1973
      %v1975 = vpop.f32.mrb[0].mxu0
      %1976 = vmatprep.mubr.bf16.mxu0 0
      %1977 = vmatmul.mubr.bf16.gmra.mrb[0].mxu0 %v1704
      %v1978 = vpop.f32.mrb[0].mxu0
      %v1979 = vadd.f32 %v1653, %v1978
      %v1980 = vpop.f32.mrb[0].mxu0
      %v1981 = vpop.f32.mrb[0].mxu0
      %v1982 = vadd.f32 %v1653, %v1981
      %v1983 = vpop.f32.mrb[0].mxu0
      %1984 = vmatprep.mubr.bf16.mxu0 0
      %1985 = vmatmul.mubr.bf16.gmra.mrb[0].mxu0 %v1707
      %v1986 = vpop.f32.mrb[0].mxu0
      %v1987 = vadd.f32 %v1653, %v1986
      %v1988 = vpop.f32.mrb[0].mxu0
      %v1989 = vpop.f32.mrb[0].mxu0
      %v1990 = vadd.f32 %v1653, %v1989
      %v1991 = vpop.f32.mrb[0].mxu0
      %1992 = vmatprep.mubr.bf16.mxu0 0
      %1993 = vmatmul.mubr.bf16.gmra.mrb[0].mxu0 %v1710
      %v1994 = vpop.f32.mrb[0].mxu0
      %v1995 = vadd.f32 %v1653, %v1994
      %v1996 = vpop.f32.mrb[0].mxu0
      %v1997 = vpop.f32.mrb[0].mxu0
      %v1998 = vadd.f32 %v1653, %v1997
      %v1999 = vpop.f32.mrb[0].mxu0
      %2000 = vmatprep.mubr.bf16.mxu0 0
      %2001 = vmatmul.mubr.bf16.gmra.mrb[0].mxu0 %v1713
      %v2002 = vpop.f32.mrb[0].mxu0
      %v2003 = vadd.f32 %v1653, %v2002
      %v2004 = vpop.f32.mrb[0].mxu0
      %v2005 = vpop.f32.mrb[0].mxu0
      %v2006 = vadd.f32 %v1653, %v2005
      %v2007 = vpop.f32.mrb[0].mxu0
      %2008 = vmatprep.mubr.bf16.mxu0 0
      %2009 = vmatmul.mubr.bf16.gmra.mrb[0].mxu0 %v1716
      %v2010 = vpop.f32.mrb[0].mxu0
      %v2011 = vadd.f32 %v1653, %v2010
      %v2012 = vpop.f32.mrb[0].mxu0
      %v2013 = vpop.f32.mrb[0].mxu0
      %v2014 = vadd.f32 %v1653, %v2013
      %v2015 = vpop.f32.mrb[0].mxu0
      %2016 = vmatprep.mubr.bf16.mxu0 0
      %2017 = vmatmul.mubr.bf16.gmra.mrb[0].mxu0 %v1719
      %v2018 = vpop.f32.mrb[0].mxu0
      %v2019 = vadd.f32 %v1653, %v2018
      %v2020 = vpop.f32.mrb[0].mxu0
      %v2021 = vpop.f32.mrb[0].mxu0
      %v2022 = vadd.f32 %v1653, %v2021
      %v2023 = vpop.f32.mrb[0].mxu0
      %2024 = vmatprep.mubr.bf16.mxu0 0
      %2025 = vmatmul.mubr.bf16.gmra.mrb[0].mxu0 %v1722
      %v2026 = vpop.f32.mrb[0].mxu0
      %v2027 = vadd.f32 %v1653, %v2026
      %v2028 = vpop.f32.mrb[0].mxu0
      %v2029 = vpop.f32.mrb[0].mxu0
      %v2030 = vadd.f32 %v1653, %v2029
      %v2031 = vpop.f32.mrb[0].mxu0
      %2032 = vmatprep.mubr.bf16.mxu0 0
      %2033 = vmatmul.mubr.bf16.gmra.mrb[0].mxu0 %v1725
      %v2034 = vpop.f32.mrb[0].mxu0
      %v2035 = vadd.f32 %v1653, %v2034
      %v2036 = vpop.f32.mrb[0].mxu0
      %v2037 = vpop.f32.mrb[0].mxu0
      %v2038 = vadd.f32 %v1653, %v2037
      %v2039 = vpop.f32.mrb[0].mxu0
      %2040 = vmatprep.mubr.bf16.mxu0 0
      %2041 = vmatmul.mubr.bf16.gmra.mrb[0].mxu0 %v1728
      %v2042 = vpop.f32.mrb[0].mxu0
      %v2043 = vadd.f32 %v1653, %v2042
      %v2044 = vpop.f32.mrb[0].mxu0
      %v2045 = vpop.f32.mrb[0].mxu0
      %v2046 = vadd.f32 %v1653, %v2045
      %v2047 = vpop.f32.mrb[0].mxu0
      %2048 = vmatprep.mubr.bf16.mxu0 0
      %2049 = vmatmul.mubr.bf16.gmra.mrb[0].mxu0 %v1731
      %v2050 = vpop.f32.mrb[0].mxu0
      %v2051 = vadd.f32 %v1653, %v2050
      %v2052 = vpop.f32.mrb[0].mxu0
      %v2053 = vpop.f32.mrb[0].mxu0
      %v2054 = vadd.f32 %v1653, %v2053
      %v2055 = vpop.f32.mrb[0].mxu0
      %2056 = vmatprep.mubr.bf16.mxu0 0
      %2057 = vmatmul.mubr.bf16.gmra.mrb[0].mxu0 %v1734
      %v2058 = vpop.f32.mrb[0].mxu0
      %v2059 = vadd.f32 %v1653, %v2058
      %v2060 = vpop.f32.mrb[0].mxu0
      %v2061 = vpop.f32.mrb[0].mxu0
      %v2062 = vadd.f32 %v1653, %v2061
      %v2063 = vpop.f32.mrb[0].mxu0
      %2064 = vmatprep.mubr.bf16.mxu0 0
      %2065 = vmatmul.mubr.bf16.gmra.mrb[0].mxu0 %v1737
      %v2066 = vpop.f32.mrb[0].mxu0
      %v2067 = vadd.f32 %v1653, %v2066
      %v2068 = vpop.f32.mrb[0].mxu0
      %v2069 = vpop.f32.mrb[0].mxu0
      %v2070 = vadd.f32 %v1653, %v2069
      %v2071 = vpop.f32.mrb[0].mxu0
      %2072 = vmatprep.mubr.bf16.mxu0 0
      %2073 = vmatmul.mubr.bf16.gmra.mrb[0].mxu0 %v1740
      %v2074 = vpop.f32.mrb[0].mxu0
      %v2075 = vadd.f32 %v1653, %v2074
      %v2076 = vpop.f32.mrb[0].mxu0
      %v2077 = vpop.f32.mrb[0].mxu0
      %v2078 = vadd.f32 %v1653, %v2077
      %v2079 = vpop.f32.mrb[0].mxu0
      %2080 = vmatprep.mubr.bf16.mxu0 0
      %2081 = vmatmul.mubr.bf16.gmra.mrb[0].mxu0 %v1743
      %v2082 = vpop.f32.mrb[0].mxu0
      %v2083 = vadd.f32 %v1653, %v2082
      %v2084 = vpop.f32.mrb[0].mxu0
      %v2085 = vpop.f32.mrb[0].mxu0
      %v2086 = vadd.f32 %v1653, %v2085
      %v2087 = vpop.f32.mrb[0].mxu0
      %2088 = vmatprep.mubr.bf16.mxu0 0
      %2089 = vmatmul.mubr.bf16.gmra.mrb[0].mxu0 %v1746
      %v2090 = vpop.f32.mrb[0].mxu0
      %v2091 = vadd.f32 %v1653, %v2090
      %v2092 = vpop.f32.mrb[0].mxu0
      %v2093 = vpop.f32.mrb[0].mxu0
      %v2094 = vadd.f32 %v1653, %v2093
      %v2095 = vpop.f32.mrb[0].mxu0
      %2096 = vmatprep.mubr.bf16.mxu0 0
      %2097 = vmatmul.mubr.bf16.gmra.mrb[0].mxu0 %v1749
      %v2098 = vpop.f32.mrb[0].mxu0
      %v2099 = vadd.f32 %v1653, %v2098
      %v2100 = vpop.f32.mrb[0].mxu0
      %v2101 = vpop.f32.mrb[0].mxu0
      %v2102 = vadd.f32 %v1653, %v2101
      %v2103 = vpop.f32.mrb[0].mxu0
      %2104 = vmatprep.mubr.bf16.mxu0 0
      %2105 = vmatmul.mubr.bf16.gmra.mrb[0].mxu0 %v1752
      %v2106 = vpop.f32.mrb[0].mxu0
      %v2107 = vadd.f32 %v1653, %v2106
      %v2108 = vpop.f32.mrb[0].mxu0
      %v2109 = vpop.f32.mrb[0].mxu0
      %v2110 = vadd.f32 %v1653, %v2109
      %v2111 = vpop.f32.mrb[0].mxu0
      %2112 = vmatprep.mubr.bf16.mxu0 0
      %2113 = vmatmul.mubr.bf16.gmra.mrb[0].mxu0 %v1755
      %v2114 = vpop.f32.mrb[0].mxu0
      %v2115 = vadd.f32 %v1653, %v2114
      %v2116 = vpop.f32.mrb[0].mxu0
      %v2117 = vpop.f32.mrb[0].mxu0
      %v2118 = vadd.f32 %v1653, %v2117
      %v2119 = vpop.f32.mrb[0].mxu0
      %2120 = vmatprep.mubr.bf16.mxu0 0
      %2121 = vmatmul.mubr.bf16.gmra.mrb[0].mxu0 %v1758
      %v2122 = vpop.f32.mrb[0].mxu0
      %v2123 = vadd.f32 %v1653, %v2122
      %v2124 = vpop.f32.mrb[0].mxu0
      %v2125 = vpop.f32.mrb[0].mxu0
      %v2126 = vadd.f32 %v1653, %v2125
      %v2127 = vpop.f32.mrb[0].mxu0
      %2128 = vmatprep.mubr.bf16.mxu0 0
      %2129 = vmatmul.mubr.bf16.gmra.mrb[0].mxu0 %v1761
      %v2130 = vpop.f32.mrb[0].mxu0
      %v2131 = vadd.f32 %v1653, %v2130
      %v2132 = vpop.f32.mrb[0].mxu0
      %v2133 = vpop.f32.mrb[0].mxu0
      %v2134 = vadd.f32 %v1653, %v2133
      %v2135 = vpop.f32.mrb[0].mxu0
      %2136 = vmatprep.mubr.bf16.mxu0 0
      %2137 = vmatmul.mubr.bf16.gmra.mrb[0].mxu0 %v1764
      %v2138 = vpop.f32.mrb[0].mxu0
      %v2139 = vadd.f32 %v1653, %v2138
      %v2140 = vpop.f32.mrb[0].mxu0
      %v2141 = vpop.f32.mrb[0].mxu0
      %v2142 = vadd.f32 %v1653, %v2141
      %v2143 = vpop.f32.mrb[0].mxu0
      %2144 = vmatprep.mubr.bf16.mxu0 0
      %2145 = vmatmul.mubr.bf16.gmra.mrb[0].mxu0 %v1767
      %v2146 = vpop.f32.mrb[0].mxu0
      %v2147 = vadd.f32 %v1653, %v2146
      %v2148 = vpop.f32.mrb[0].mxu0
      %v2149 = vpop.f32.mrb[0].mxu0
      %v2150 = vadd.f32 %v1653, %v2149
      %v2151 = vpop.f32.mrb[0].mxu0
      %2152 = vmatprep.mubr.bf16.mxu0 0
      %2153 = vmatmul.mubr.bf16.gmra.mrb[0].mxu0 %v1770
      %v2154 = vpop.f32.mrb[0].mxu0
      %v2155 = vadd.f32 %v1653, %v2154
      %v2156 = vpop.f32.mrb[0].mxu0
      %v2157 = vpop.f32.mrb[0].mxu0
      %v2158 = vadd.f32 %v1653, %v2157
      %v2159 = vpop.f32.mrb[0].mxu0
      %2160 = vmatprep.mubr.bf16.mxu0 0
      %2161 = vmatmul.mubr.bf16.gmra.mrb[0].mxu0 %v1773
      %v2162 = vpop.f32.mrb[0].mxu0
      %v2163 = vadd.f32 %v1653, %v2162
      %v2164 = vpop.f32.mrb[0].mxu0
      %v2165 = vpop.f32.mrb[0].mxu0
      %v2166 = vadd.f32 %v1653, %v2165
      %v2167 = vpop.f32.mrb[0].mxu0
      %2168 = vmatprep.mubr.bf16.mxu0 0
      %2169 = vmatmul.mubr.bf16.gmra.mrb[0].mxu0 %v1776
      %v2170 = vpop.f32.mrb[0].mxu0
      %v2171 = vadd.f32 %v1653, %v2170
      %v2172 = vpop.f32.mrb[0].mxu0
      %v2173 = vpop.f32.mrb[0].mxu0
      %v2174 = vadd.f32 %v1653, %v2173
      %v2175 = vpop.f32.mrb[0].mxu0
      %2176 = vmatprep.mubr.bf16.mxu0 0
      %2177 = vmatmul.mubr.bf16.gmra.mrb[0].mxu0 %v1779
      %v2178 = vpop.f32.mrb[0].mxu0
      %v2179 = vadd.f32 %v1653, %v2178
      %v2180 = vpop.f32.mrb[0].mxu0
      %v2181 = vpop.f32.mrb[0].mxu0
      %v2182 = vadd.f32 %v1653, %v2181
      %v2183 = vpop.f32.mrb[0].mxu0
      %2184 = vmatprep.mubr.bf16.mxu0 0
      %2185 = vmatmul.mubr.bf16.gmra.mrb[0].mxu0 %v1782
      %v2186 = vpop.f32.mrb[0].mxu0
      %v2187 = vadd.f32 %v1653, %v2186
      %v2188 = vpop.f32.mrb[0].mxu0
      %v2189 = vpop.f32.mrb[0].mxu0
      %v2190 = vadd.f32 %v1653, %v2189
      %v2191 = vpop.f32.mrb[0].mxu0
      %2192 = vmatprep.mubr.bf16.mxu0 0
      %2193 = vmatmul.mubr.bf16.gmra.mrb[0].mxu0 %v1785
      %v2194 = vpop.f32.mrb[0].mxu0
      %v2195 = vadd.f32 %v1653, %v2194
      %v2196 = vpop.f32.mrb[0].mxu0
      %v2197 = vpop.f32.mrb[0].mxu0
      %v2198 = vadd.f32 %v1653, %v2197
      %v2199 = vpop.f32.mrb[0].mxu0
      %2200 = vmatprep.mubr.bf16.mxu0 0
      %2201 = vmatmul.mubr.bf16.gmra.mrb[0].mxu0 %v1788
      %v2202 = vpop.f32.mrb[0].mxu0
      %v2203 = vadd.f32 %v1653, %v2202
      %v2204 = vpop.f32.mrb[0].mxu0
      %v2205 = vpop.f32.mrb[0].mxu0
      %v2206 = vadd.f32 %v1653, %v2205
      %v2207 = vpop.f32.mrb[0].mxu0
      %2208 = vmatprep.mubr.bf16.mxu0 0
      %2209 = vmatmul.mubr.bf16.gmra.mrb[0].mxu0 %v1791
      %v2210 = vpop.f32.mrb[0].mxu0
      %v2211 = vadd.f32 %v1653, %v2210
      %v2212 = vpop.f32.mrb[0].mxu0
      %v2213 = vpop.f32.mrb[0].mxu0
      %v2214 = vadd.f32 %v1653, %v2213
      %v2215 = vpop.f32.mrb[0].mxu0
      %2216 = vmatprep.mubr.bf16.mxu0 0
      %2217 = vmatmul.mubr.bf16.gmra.mrb[0].mxu0 %v1794
      %v2218 = vpop.f32.mrb[0].mxu0
      %v2219 = vadd.f32 %v1653, %v2218
      %v2220 = vpop.f32.mrb[0].mxu0
      %v2221 = vpop.f32.mrb[0].mxu0
      %v2222 = vadd.f32 %v1653, %v2221
      %v2223 = vpop.f32.mrb[0].mxu0
      %2224 = vmatprep.mubr.bf16.mxu0 0
      %2225 = vmatmul.mubr.bf16.gmra.mrb[0].mxu0 %v1797
      %v2226 = vpop.f32.mrb[0].mxu0
      %v2227 = vadd.f32 %v1653, %v2226
      %v2228 = vpop.f32.mrb[0].mxu0
      %v2229 = vpop.f32.mrb[0].mxu0
      %v2230 = vadd.f32 %v1653, %v2229
      %v2231 = vpop.f32.mrb[0].mxu0
      %2232 = vmatprep.mubr.bf16.mxu0 0
      %2233 = vmatmul.mubr.bf16.gmra.mrb[0].mxu0 %v1800
      %v2234 = vpop.f32.mrb[0].mxu0
      %v2235 = vadd.f32 %v1653, %v2234
      %v2236 = vpop.f32.mrb[0].mxu0
      %v2237 = vpop.f32.mrb[0].mxu0
      %v2238 = vadd.f32 %v1653, %v2237
      %v2239 = vpop.f32.mrb[0].mxu0
      %2240 = vmatprep.mubr.bf16.mxu0 0
      %2241 = vmatmul.mubr.bf16.gmra.mrb[0].mxu0 %v1803
      %v2242 = vpop.f32.mrb[0].mxu0
      %v2243 = vadd.f32 %v1653, %v2242
      %v2244 = vpop.f32.mrb[0].mxu0
      %v2245 = vpop.f32.mrb[0].mxu0
      %v2246 = vadd.f32 %v1653, %v2245
      %v2247 = vpop.f32.mrb[0].mxu0
      %2248 = vmatprep.mubr.bf16.mxu0 0
      %2249 = vmatmul.mubr.bf16.gmra.mrb[0].mxu0 %v1806
      %v2250 = vpop.f32.mrb[0].mxu0
      %v2251 = vadd.f32 %v1653, %v2250
      %v2252 = vpop.f32.mrb[0].mxu0
      %v2253 = vpop.f32.mrb[0].mxu0
      %v2254 = vadd.f32 %v1653, %v2253
      %v2255 = vpop.f32.mrb[0].mxu0
      %2256 = vmatprep.mubr.bf16.mxu0 0
      %2257 = vmatmul.mubr.bf16.gmra.mrb[0].mxu0 %v1809
      %v2258 = vpop.f32.mrb[0].mxu0
      %v2259 = vadd.f32 %v1653, %v2258
      %v2260 = vpop.f32.mrb[0].mxu0
      %v2261 = vpop.f32.mrb[0].mxu0
      %v2262 = vadd.f32 %v1653, %v2261
      %v2263 = vpop.f32.mrb[0].mxu0
      %2264 = vmatprep.mubr.bf16.mxu0 0
      %2265 = vmatmul.mubr.bf16.gmra.mrb[0].mxu0 %v1812
      %v2266 = vpop.f32.mrb[0].mxu0
      %v2267 = vadd.f32 %v1653, %v2266
      %v2268 = vpop.f32.mrb[0].mxu0
      %v2269 = vpop.f32.mrb[0].mxu0
      %v2270 = vadd.f32 %v1653, %v2269
      %v2271 = vpop.f32.mrb[0].mxu0
      %2272 = vmatprep.mubr.bf16.mxu0 0
      %2273 = vmatmul.mubr.bf16.gmra.mrb[0].mxu0 %v1815
      %v2274 = vpop.f32.mrb[0].mxu0
      %v2275 = vadd.f32 %v1653, %v2274
      %v2276 = vpop.f32.mrb[0].mxu0
      %v2277 = vpop.f32.mrb[0].mxu0
      %v2278 = vadd.f32 %v1653, %v2277
      %v2279 = vpop.f32.mrb[0].mxu0
      %2280 = vmatprep.mubr.bf16.mxu0 0
      %2281 = vmatmul.mubr.bf16.gmra.mrb[0].mxu0 %v1818
      %v2282 = vpop.f32.mrb[0].mxu0
      %v2283 = vadd.f32 %v1653, %v2282
      %v2284 = vpop.f32.mrb[0].mxu0
      %v2285 = vpop.f32.mrb[0].mxu0
      %v2286 = vadd.f32 %v1653, %v2285
      %v2287 = vpop.f32.mrb[0].mxu0
      %2288 = vmatprep.mubr.bf16.mxu0 0
      %2289 = vmatmul.mubr.bf16.gmra.mrb[0].mxu0 %v1821
      %v2290 = vpop.f32.mrb[0].mxu0
      %v2291 = vadd.f32 %v1653, %v2290
      %v2292 = vpop.f32.mrb[0].mxu0
      %v2293 = vpop.f32.mrb[0].mxu0
      %v2294 = vadd.f32 %v1653, %v2293
      %v2295 = vpop.f32.mrb[0].mxu0
      %2296 = vmatprep.mubr.bf16.mxu0 0
      %2297 = vmatmul.mubr.bf16.gmra.mrb[0].mxu0 %v1824
      %v2298 = vpop.f32.mrb[0].mxu0
      %v2299 = vadd.f32 %v1653, %v2298
      %v2300 = vpop.f32.mrb[0].mxu0
      %v2301 = vpop.f32.mrb[0].mxu0
      %v2302 = vadd.f32 %v1653, %v2301
      %v2303 = vpop.f32.mrb[0].mxu0
      %2304 = vmatprep.mubr.bf16.mxu0 0
      %2305 = vmatmul.mubr.bf16.gmra.mrb[0].mxu0 %v1827
      %v2306 = vpop.f32.mrb[0].mxu0
      %v2307 = vadd.f32 %v1653, %v2306
      %v2308 = vpop.f32.mrb[0].mxu0
      %v2309 = vpop.f32.mrb[0].mxu0
      %v2310 = vadd.f32 %v1653, %v2309
      %v2311 = vpop.f32.mrb[0].mxu0
      %2312 = vmatprep.mubr.bf16.mxu0 0
      %2313 = vmatmul.mubr.bf16.gmra.mrb[0].mxu0 %v1830
      %v2314 = vpop.f32.mrb[0].mxu0
      %v2315 = vadd.f32 %v1653, %v2314
      %v2316 = vpop.f32.mrb[0].mxu0
      %v2317 = vpop.f32.mrb[0].mxu0
      %v2318 = vpop.f32.mrb[0].mxu0
      %2319 = vdwg.mxu0
      %vm2320 = vcmask 654336
      %2321 = vst.msk [vmem:[%s264] sm:$0xff] %vm2320, %v1867
      %2322 = vst.msk [vmem:[%s264 + $0x8] sm:$0xff] %vm2320, %v1870
      %2323 = vst.msk [vmem:[%s264 + $0x10] sm:$0xff] %vm2320, %v1875
      %2324 = vst.msk [vmem:[%s264 + $0x18] sm:$0xff] %vm2320, %v1878
      %2325 = vst.msk [vmem:[%s264 + $0x20] sm:$0xff] %vm2320, %v1883
      %2326 = vst.msk [vmem:[%s264 + $0x28] sm:$0xff] %vm2320, %v1886
      %2327 = vst.msk [vmem:[%s264 + $0x30] sm:$0xff] %vm2320, %v1891
      %2328 = vst.msk [vmem:[%s264 + $0x38] sm:$0xff] %vm2320, %v1894
      %2329 = vst.msk [vmem:[%s264 + $0x40] sm:$0xff] %vm2320, %v1899
      %2330 = vst.msk [vmem:[%s264 + $0x48] sm:$0xff] %vm2320, %v1902
      %2331 = vst.msk [vmem:[%s264 + $0x50] sm:$0xff] %vm2320, %v1907
      %2332 = vst.msk [vmem:[%s264 + $0x58] sm:$0xff] %vm2320, %v1910
      %2333 = vst.msk [vmem:[%s264 + $0x60] sm:$0xff] %vm2320, %v1915
      %2334 = vst.msk [vmem:[%s264 + $0x68] sm:$0xff] %vm2320, %v1918
      %2335 = vst.msk [vmem:[%s264 + $0x70] sm:$0xff] %vm2320, %v1923
      %2336 = vst.msk [vmem:[%s264 + $0x78] sm:$0xff] %vm2320, %v1926
      %2337 = vst.msk [vmem:[%s264 + $0x80] sm:$0xff] %vm2320, %v1931
      %2338 = vst.msk [vmem:[%s264 + $0x88] sm:$0xff] %vm2320, %v1934
      %2339 = vst.msk [vmem:[%s264 + $0x90] sm:$0xff] %vm2320, %v1939
      %2340 = vst.msk [vmem:[%s264 + $0x98] sm:$0xff] %vm2320, %v1942
      %2341 = vst.msk [vmem:[%s264 + $0xa0] sm:$0xff] %vm2320, %v1947
      %2342 = vst.msk [vmem:[%s264 + $0xa8] sm:$0xff] %vm2320, %v1950
      %2343 = vst.msk [vmem:[%s264 + $0xb0] sm:$0xff] %vm2320, %v1955
      %2344 = vst.msk [vmem:[%s264 + $0xb8] sm:$0xff] %vm2320, %v1958
      %2345 = vst.msk [vmem:[%s264 + $0xc0] sm:$0xff] %vm2320, %v1963
      %2346 = vst.msk [vmem:[%s264 + $0xc8] sm:$0xff] %vm2320, %v1966
      %2347 = vst.msk [vmem:[%s264 + $0xd0] sm:$0xff] %vm2320, %v1971
      %2348 = vst.msk [vmem:[%s264 + $0xd8] sm:$0xff] %vm2320, %v1974
      %2349 = vst.msk [vmem:[%s264 + $0xe0] sm:$0xff] %vm2320, %v1979
      %2350 = vst.msk [vmem:[%s264 + $0xe8] sm:$0xff] %vm2320, %v1982
      %2351 = vst.msk [vmem:[%s264 + $0xf0] sm:$0xff] %vm2320, %v1987
      %2352 = vst.msk [vmem:[%s264 + $0xf8] sm:$0xff] %vm2320, %v1990
      %2353 = vst.msk [vmem:[%s264 + $0x100] sm:$0xff] %vm2320, %v1995
      %2354 = vst.msk [vmem:[%s264 + $0x108] sm:$0xff] %vm2320, %v1998
      %2355 = vst.msk [vmem:[%s264 + $0x110] sm:$0xff] %vm2320, %v2003
      %2356 = vst.msk [vmem:[%s264 + $0x118] sm:$0xff] %vm2320, %v2006
      %2357 = vst.msk [vmem:[%s264 + $0x120] sm:$0xff] %vm2320, %v2011
      %2358 = vst.msk [vmem:[%s264 + $0x128] sm:$0xff] %vm2320, %v2014
      %2359 = vst.msk [vmem:[%s264 + $0x130] sm:$0xff] %vm2320, %v2019
      %2360 = vst.msk [vmem:[%s264 + $0x138] sm:$0xff] %vm2320, %v2022
      %2361 = vst.msk [vmem:[%s264 + $0x140] sm:$0xff] %vm2320, %v2027
      %2362 = vst.msk [vmem:[%s264 + $0x148] sm:$0xff] %vm2320, %v2030
      %2363 = vst.msk [vmem:[%s264 + $0x150] sm:$0xff] %vm2320, %v2035
      %2364 = vst.msk [vmem:[%s264 + $0x158] sm:$0xff] %vm2320, %v2038
      %2365 = vst.msk [vmem:[%s264 + $0x160] sm:$0xff] %vm2320, %v2043
      %2366 = vst.msk [vmem:[%s264 + $0x168] sm:$0xff] %vm2320, %v2046
      %2367 = vst.msk [vmem:[%s264 + $0x170] sm:$0xff] %vm2320, %v2051
      %2368 = vst.msk [vmem:[%s264 + $0x178] sm:$0xff] %vm2320, %v2054
      %2369 = vst.msk [vmem:[%s264 + $0x180] sm:$0xff] %vm2320, %v2059
      %2370 = vst.msk [vmem:[%s264 + $0x188] sm:$0xff] %vm2320, %v2062
      %2371 = vst.msk [vmem:[%s264 + $0x190] sm:$0xff] %vm2320, %v2067
      %2372 = vst.msk [vmem:[%s264 + $0x198] sm:$0xff] %vm2320, %v2070
      %2373 = vst.msk [vmem:[%s264 + $0x1a0] sm:$0xff] %vm2320, %v2075
      %2374 = vst.msk [vmem:[%s264 + $0x1a8] sm:$0xff] %vm2320, %v2078
      %2375 = vst.msk [vmem:[%s264 + $0x1b0] sm:$0xff] %vm2320, %v2083
      %2376 = vst.msk [vmem:[%s264 + $0x1b8] sm:$0xff] %vm2320, %v2086
      %2377 = vst.msk [vmem:[%s264 + $0x1c0] sm:$0xff] %vm2320, %v2091
      %2378 = vst.msk [vmem:[%s264 + $0x1c8] sm:$0xff] %vm2320, %v2094
      %2379 = vst.msk [vmem:[%s264 + $0x1d0] sm:$0xff] %vm2320, %v2099
      %2380 = vst.msk [vmem:[%s264 + $0x1d8] sm:$0xff] %vm2320, %v2102
      %2381 = vst.msk [vmem:[%s264 + $0x1e0] sm:$0xff] %vm2320, %v2107
      %2382 = vst.msk [vmem:[%s264 + $0x1e8] sm:$0xff] %vm2320, %v2110
      %2383 = vst.msk [vmem:[%s264 + $0x1f0] sm:$0xff] %vm2320, %v2115
      %2384 = vst.msk [vmem:[%s264 + $0x1f8] sm:$0xff] %vm2320, %v2118
      %2385 = vst.msk [vmem:[%s264 + $0x200] sm:$0xff] %vm2320, %v2123
      %2386 = vst.msk [vmem:[%s264 + $0x208] sm:$0xff] %vm2320, %v2126
      %2387 = vst.msk [vmem:[%s264 + $0x210] sm:$0xff] %vm2320, %v2131
      %2388 = vst.msk [vmem:[%s264 + $0x218] sm:$0xff] %vm2320, %v2134
      %2389 = vst.msk [vmem:[%s264 + $0x220] sm:$0xff] %vm2320, %v2139
      %2390 = vst.msk [vmem:[%s264 + $0x228] sm:$0xff] %vm2320, %v2142
      %2391 = vst.msk [vmem:[%s264 + $0x230] sm:$0xff] %vm2320, %v2147
      %2392 = vst.msk [vmem:[%s264 + $0x238] sm:$0xff] %vm2320, %v2150
      %2393 = vst.msk [vmem:[%s264 + $0x240] sm:$0xff] %vm2320, %v2155
      %2394 = vst.msk [vmem:[%s264 + $0x248] sm:$0xff] %vm2320, %v2158
      %2395 = vst.msk [vmem:[%s264 + $0x250] sm:$0xff] %vm2320, %v2163
      %2396 = vst.msk [vmem:[%s264 + $0x258] sm:$0xff] %vm2320, %v2166
      %2397 = vst.msk [vmem:[%s264 + $0x260] sm:$0xff] %vm2320, %v2171
      %2398 = vst.msk [vmem:[%s264 + $0x268] sm:$0xff] %vm2320, %v2174
      %2399 = vst.msk [vmem:[%s264 + $0x270] sm:$0xff] %vm2320, %v2179
      %2400 = vst.msk [vmem:[%s264 + $0x278] sm:$0xff] %vm2320, %v2182
      %2401 = vst.msk [vmem:[%s264 + $0x280] sm:$0xff] %vm2320, %v2187
      %2402 = vst.msk [vmem:[%s264 + $0x288] sm:$0xff] %vm2320, %v2190
      %2403 = vst.msk [vmem:[%s264 + $0x290] sm:$0xff] %vm2320, %v2195
      %2404 = vst.msk [vmem:[%s264 + $0x298] sm:$0xff] %vm2320, %v2198
      %2405 = vst.msk [vmem:[%s264 + $0x2a0] sm:$0xff] %vm2320, %v2203
      %2406 = vst.msk [vmem:[%s264 + $0x2a8] sm:$0xff] %vm2320, %v2206
      %2407 = vst.msk [vmem:[%s264 + $0x2b0] sm:$0xff] %vm2320, %v2211
      %2408 = vst.msk [vmem:[%s264 + $0x2b8] sm:$0xff] %vm2320, %v2214
      %2409 = vst.msk [vmem:[%s264 + $0x2c0] sm:$0xff] %vm2320, %v2219
      %2410 = vst.msk [vmem:[%s264 + $0x2c8] sm:$0xff] %vm2320, %v2222
      %2411 = vst.msk [vmem:[%s264 + $0x2d0] sm:$0xff] %vm2320, %v2227
      %2412 = vst.msk [vmem:[%s264 + $0x2d8] sm:$0xff] %vm2320, %v2230
      %2413 = vst.msk [vmem:[%s264 + $0x2e0] sm:$0xff] %vm2320, %v2235
      %2414 = vst.msk [vmem:[%s264 + $0x2e8] sm:$0xff] %vm2320, %v2238
      %2415 = vst.msk [vmem:[%s264 + $0x2f0] sm:$0xff] %vm2320, %v2243
      %2416 = vst.msk [vmem:[%s264 + $0x2f8] sm:$0xff] %vm2320, %v2246
      %2417 = vst.msk [vmem:[%s264 + $0x300] sm:$0xff] %vm2320, %v2251
      %2418 = vst.msk [vmem:[%s264 + $0x308] sm:$0xff] %vm2320, %v2254
      %2419 = vst.msk [vmem:[%s264 + $0x310] sm:$0xff] %vm2320, %v2259
      %2420 = vst.msk [vmem:[%s264 + $0x318] sm:$0xff] %vm2320, %v2262
      %2421 = vst.msk [vmem:[%s264 + $0x320] sm:$0xff] %vm2320, %v2267
      %2422 = vst.msk [vmem:[%s264 + $0x328] sm:$0xff] %vm2320, %v2270
      %2423 = vst.msk [vmem:[%s264 + $0x330] sm:$0xff] %vm2320, %v2275
      %2424 = vst.msk [vmem:[%s264 + $0x338] sm:$0xff] %vm2320, %v2278
      %2425 = vst.msk [vmem:[%s264 + $0x340] sm:$0xff] %vm2320, %v2283
      %2426 = vst.msk [vmem:[%s264 + $0x348] sm:$0xff] %vm2320, %v2286
      %2427 = vst.msk [vmem:[%s264 + $0x350] sm:$0xff] %vm2320, %v2291
      %2428 = vst.msk [vmem:[%s264 + $0x358] sm:$0xff] %vm2320, %v2294
      %2429 = vst.msk [vmem:[%s264 + $0x360] sm:$0xff] %vm2320, %v2299
      %2430 = vst.msk [vmem:[%s264 + $0x368] sm:$0xff] %vm2320, %v2302
      %2431 = vst.msk [vmem:[%s264 + $0x370] sm:$0xff] %vm2320, %v2307
      %2432 = vst.msk [vmem:[%s264 + $0x378] sm:$0xff] %vm2320, %v2310
      %vm2433 = vcmask 650240
      %2434 = vst.msk [vmem:[%s264 + $0x380] sm:$0xf] %vm2433, %v2315
      %p2435 = scmp.lt.s32.totalorder %s18, 1
      %s2436 = scalar_select %p2435, %s18, 1
      %s2437 = smul.addr %s2436, 113
      %s2438 = smul.addr %s2437, 8
      %s2439 = scalar_lea.vmem %s5, %s2438
      %p2440 = scmp.lt.s32.totalorder %s18, 1
      %s2441 = scalar_select %p2440, %s18, 1
      %s2442 = smul.addr %s2441, 113
      %s2443 = smul.addr %s2442, 8
      %s2444 = scalar_lea.vmem %s6, %s2443
      // Predicated region
      $region41: #{tpu_custom_call.1} parent=39 // pred_check
        %p2445 = pneg %p146
      $region42: #{tpu_custom_call.1} parent=39 // pred_check_branch
        %2447 = sbr.rel (%p2445) target = $region44
      $region43: #{tpu_custom_call.1} parent=39 // pred_region
        _
      $region44: #{tpu_custom_call.1} parent=39 // pred_fallthru
        _
      // Predicated region
      $region45: #{tpu_custom_call.1} parent=39 // pred_check
        %p2448 = pneg %p172
      $region46: #{tpu_custom_call.1} parent=39 // pred_check_branch
        %2450 = sbr.rel (%p2448) target = $region48
      $region47: #{tpu_custom_call.1} parent=39 // pred_region
        _
      $region48: #{tpu_custom_call.1} parent=39 // pred_fallthru
        _
    $region40: #{tpu_custom_call.1} parent=5 // pred_fallthru
      _
    %p2451 = scmp.le.s32.totalorder 2, %s13
    // Predicated region
    $region49: #{tpu_custom_call.1} parent=5 // pred_check
      %p2452 = pneg %p2451
    $region50: #{tpu_custom_call.1} parent=5 // pred_check_branch
      %2454 = sbr.rel (%p2452) target = $region52
    $region51: #{tpu_custom_call.1} parent=5 // pred_region
      %s2455 = ssub.s32 %s13, 2
      // Predicated region
      $region53: #{tpu_custom_call.1} parent=51 // pred_check
        %p2456 = pneg %p152
      $region54: #{tpu_custom_call.1} parent=51 // pred_check_branch
        %2458 = sbr.rel (%p2456) target = $region56
      $region55: #{tpu_custom_call.1} parent=51 // pred_region
        %p2459 = scmp.lt.s32.totalorder %s19, 1
        %s2460 = scalar_select %p2459, %s19, 1
        %s2461 = smul.addr %s2460, 113
        %s2462 = smul.addr %s2461, 8
        %s2463 = scalar_lea.vmem %s5, %s2462
      $region56: #{tpu_custom_call.1} parent=51 // pred_fallthru
        _
      // Predicated region
      $region57: #{tpu_custom_call.1} parent=51 // pred_check
        %p2464 = pneg %p178
      $region58: #{tpu_custom_call.1} parent=51 // pred_check_branch
        %2466 = sbr.rel (%p2464) target = $region60
      $region59: #{tpu_custom_call.1} parent=51 // pred_region
        %p2467 = scmp.lt.s32.totalorder %s19, 1
        %s2468 = scalar_select %p2467, %s19, 1
        %s2469 = smul.addr %s2468, 113
        %s2470 = smul.addr %s2469, 8
        %s2471 = scalar_lea.vmem %s6, %s2470
      $region60: #{tpu_custom_call.1} parent=51 // pred_fallthru
        _
    $region52: #{tpu_custom_call.1} parent=5 // pred_fallthru
      _
  $region6: #{tpu_custom_call.1} parent=0 // loop_footer
    %s17 = sadd.s32 1, %s13
  $region7: #{tpu_custom_call.1} parent=0 // loop_footer_branch
    %12 = sbr.rel target = $region3
  $region8: #{tpu_custom_call.1} parent=0 // loop_exit
    _

</llo_original>
